<compile_context>
chip_gen: v7x
topology: tpu7x:2x2x1
jax: 0.10.0
libtpu: 0.0.40
codegen_flags: <defaults>
</compile_context>

<pallas_src>
import jax
import jax.numpy as jnp
from jax.experimental import pallas as pl
from jax.experimental.pallas import tpu as pltpu

IN_DIM = 512                 # channels
SPATIAL = 4                  # 2x2 spatial positions, folded into the K axis
K_DIM = IN_DIM * SPATIAL     # 2048
OUT_DIM = 128
OUT_FUSED = 2 * OUT_DIM      # [W_A | W_B] -> 256 output lanes (lane-dense stores)
TILE_N_MAX = 512             # rows per grid step (multiple of 8); ~11 MiB/block double-buffered


def _fused_encode_kernel(x_ref, w_ref, b_ref, o_ref):
    # x_ref: (tile_n, 2048) compute dtype; w_ref: (2048, 256) compute dtype
    # b_ref: (1, 256) f32;   o_ref: (tile_n, 256) f32
    lin = jnp.dot(x_ref[...], w_ref[...], preferred_element_type=jnp.float32)  # MXU, f32 acc
    lin = lin + b_ref[...]                                                     # f32 bias
    o_ref[...] = jax.nn.sigmoid(lin).astype(o_ref.dtype)                       # f32 sigmoid (EUP)


def _round_up(x, m):
    return ((x + m - 1) // m) * m


def _fused_encode(x_flat, w_fused, b_fused, compute_dtype=jnp.bfloat16):
    """x_flat: (N, 2048) -> sigmoid(x @ W' + b) : (N, 256), tiled over N."""
    n = x_flat.shape[0]
    n_pad = _round_up(n, 8)
    if n_pad <= TILE_N_MAX:
        tile_n = n_pad
    else:
        tile_n = TILE_N_MAX
        n_pad = _round_up(n, TILE_N_MAX)

    x = x_flat.astype(compute_dtype)
    if n_pad != n:
        x = jnp.pad(x, ((0, n_pad - n), (0, 0)))          # zero rows -> sigmoid(b), sliced off
    w = w_fused.astype(compute_dtype)
    b = b_fused.reshape(1, OUT_FUSED).astype(jnp.float32)

    grid = (n_pad // tile_n,)
    bytes_accessed = (x.size * x.dtype.itemsize + w.size * w.dtype.itemsize
                      + b.size * 4 + n_pad * OUT_FUSED * 4)
    cost = pl.CostEstimate(flops=2 * n_pad * K_DIM * OUT_FUSED,
                           transcendentals=n_pad * OUT_FUSED,
                           bytes_accessed=bytes_accessed)

    out = pl.pallas_call(
        _fused_encode_kernel,
        out_shape=jax.ShapeDtypeStruct((n_pad, OUT_FUSED), jnp.float32),
        grid=grid,
        in_specs=[
            pl.BlockSpec((tile_n, K_DIM), lambda i: (i, 0)),       # activation rows, pipelined
            pl.BlockSpec((K_DIM, OUT_FUSED), lambda i: (0, 0)),    # weight: resident in VMEM
            pl.BlockSpec((1, OUT_FUSED), lambda i: (0, 0)),        # bias:   resident in VMEM
        ],
        out_specs=pl.BlockSpec((tile_n, OUT_FUSED), lambda i: (i, 0)),
        compiler_params=pltpu.CompilerParams(
            dimension_semantics=("parallel",),               # megacore-shard row blocks (v7x)
            vmem_limit_bytes=32 * 1024 * 1024),               # explicit cap, fits all chips
        cost_estimate=cost,
    )(x, w, b)
    return out[:n]


def bpr_forward(params, enc_A_old, enc_B_old, enc_B1_old, metric="AUC",
                compute_dtype=jnp.bfloat16):
    assert metric in ("AUC", "MRR")
    # Channel-major flatten of NCHW: flat index = c*4 + s.  No transpose needed.
    x_a = enc_A_old.reshape(-1, K_DIM).astype(jnp.float32)
    x_b = enc_B_old.reshape(-1, K_DIM).astype(jnp.float32)
    x_b1 = enc_B1_old.reshape(-1, K_DIM).astype(jnp.float32)
    n_a, n_b = x_a.shape[0], x_b.shape[0]
    x = jnp.concatenate([x_a, x_b, x_b1], axis=0)

    # Fold the 2x2 average pool into the weights: W'[c*4+s, :] = W[c, :] / 4
    # (repeat along K per-channel, matching the channel-major flatten above),
    # and stack [W_A | W_B] so one GEMM serves all three encoders.
    w_fused = jnp.concatenate(
        [jnp.repeat(params["enc_A_W"].astype(jnp.float32), SPATIAL, axis=0),
         jnp.repeat(params["enc_B_W"].astype(jnp.float32), SPATIAL, axis=0)],
        axis=1) * (1.0 / SPATIAL)
    b_fused = jnp.concatenate(
        [params["enc_A_b"], params["enc_B_b"]]).astype(jnp.float32)

    out = _fused_encode(x, w_fused, b_fused, compute_dtype=compute_dtype)

    enc_A = out[:n_a, :OUT_DIM]
    enc_B = out[n_a:n_a + n_b, OUT_DIM:]
    enc_B1 = out[n_a + n_b:, OUT_DIM:]
    if metric == "AUC":
        enc_B1 = enc_B1.reshape(enc_B1_old.shape[0], 3, OUT_DIM)
    return enc_A, enc_B, enc_B1


def init_params(key):
    """Deterministic xavier_uniform for weights, zeros for biases (matches nn.init)."""
    kA, kB = jax.random.split(key)
    bound = (6.0 / (IN_DIM + OUT_DIM)) ** 0.5
    return {
        "enc_A_W": jax.random.uniform(kA, (IN_DIM, OUT_DIM), jnp.float32, -bound, bound),
        "enc_A_b": jnp.zeros((OUT_DIM,), jnp.float32),
        "enc_B_W": jax.random.uniform(kB, (IN_DIM, OUT_DIM), jnp.float32, -bound, bound),
        "enc_B_b": jnp.zeros((OUT_DIM,), jnp.float32),
    }


def _reference(params, enc_A_old, enc_B_old, enc_B1_old):
    def enc(x, W, b):
        pooled = jnp.mean(x, axis=(2, 3))                    # avg_pool2d(2,2) on a 2x2 map
        return jax.nn.sigmoid(pooled @ W + b)
    a = enc(enc_A_old, params["enc_A_W"], params["enc_A_b"])
    bb = enc(enc_B_old, params["enc_B_W"], params["enc_B_b"])
    B = enc_B1_old.shape[0]
    b1 = enc(enc_B1_old.reshape(-1, IN_DIM, 2, 2),
             params["enc_B_W"], params["enc_B_b"]).reshape(B, 3, OUT_DIM)
    return a, bb, b1


if __name__ == "__main__":
    key = jax.random.PRNGKey(0)
    kp, k1, k2, k3 = jax.random.split(key, 4)
    params = init_params(kp)

    batch = 2
    enc_A_old = jax.random.normal(k1, (batch, IN_DIM, 2, 2), jnp.float32)
    enc_B_old = jax.random.normal(k2, (batch, IN_DIM, 2, 2), jnp.float32)
    enc_B1_old = jax.random.normal(k3, (batch, 3, IN_DIM, 2, 2), jnp.float32)

    ref_A, ref_B, ref_B1 = _reference(params, enc_A_old, enc_B_old, enc_B1_old)

    # Performance path: bf16 operands, f32 accumulation (relaxed tolerance per review).
    enc_A, enc_B, enc_B1 = bpr_forward(params, enc_A_old, enc_B_old, enc_B1_old,
                                       metric="AUC", compute_dtype=jnp.bfloat16)
    jax.block_until_ready((enc_A, enc_B, enc_B1))
    assert enc_A.shape == (batch, OUT_DIM)
    assert enc_B.shape == (batch, OUT_DIM)
    assert enc_B1.shape == (batch, 3, OUT_DIM)
    assert jnp.allclose(enc_A, ref_A, rtol=2e-2, atol=2e-2)
    assert jnp.allclose(enc_B, ref_B, rtol=2e-2, atol=2e-2)
    assert jnp.allclose(enc_B1, ref_B1, rtol=2e-2, atol=2e-2)

    # Verification path: full f32 operands, tight tolerance.
    f_A, f_B, f_B1 = bpr_forward(params, enc_A_old, enc_B_old, enc_B1_old,
                                 metric="AUC", compute_dtype=jnp.float32)
    jax.block_until_ready((f_A, f_B, f_B1))
    assert jnp.allclose(f_A, ref_A, rtol=1e-5, atol=1e-5)
    assert jnp.allclose(f_B, ref_B, rtol=1e-5, atol=1e-5)
    assert jnp.allclose(f_B1, ref_B1, rtol=1e-5, atol=1e-5)

    print("KERNEL_OK")
</pallas_src>

<mosaic_0001>
module attributes {stable_mosaic.version = 11 : i64} {
  func.func @_fused_encode_kernel(%arg0: i32, %arg1: memref<16x2048xbf16, #tpu.memory_space<vmem>>, %arg2: memref<2048x256xbf16, #tpu.memory_space<vmem>>, %arg3: memref<1x256xf32, #tpu.memory_space<vmem>>, %arg4: memref<16x256xf32, #tpu.memory_space<vmem>>) attributes {dimension_semantics = [#tpu.dimension_semantics<parallel>], iteration_bounds = array<i64: 1>, scalar_prefetch = 0 : i64, scratch_operands = 0 : i64, tpu.core_type = #tpu.core_type<tc>, window_params = [{transform_indices = @transform_0, window_bounds = array<i64: 16, 2048>}, {pipeline_mode = #tpu.pipeline_mode<synchronous>, transform_indices = @transform_1, window_bounds = array<i64: 2048, 256>}, {pipeline_mode = #tpu.pipeline_mode<synchronous>, transform_indices = @transform_2, window_bounds = array<i64: 1, 256>}, {transform_indices = @transform_3, window_bounds = array<i64: 16, 256>}]} {
    %c0 = arith.constant 0 : index
    %c0_0 = arith.constant 0 : index
    %0 = vector.load %arg1[%c0, %c0_0] : memref<16x2048xbf16, #tpu.memory_space<vmem>>, vector<16x2048xbf16>
    %c0_1 = arith.constant 0 : index
    %c0_2 = arith.constant 0 : index
    %1 = vector.load %arg2[%c0_1, %c0_2] : memref<2048x256xbf16, #tpu.memory_space<vmem>>, vector<2048x256xbf16>
    %cst = arith.constant dense<0.000000e+00> : vector<16x256xf32>
    %2 = tpu.matmul %0, %1, %cst {dimension_numbers = #tpu.dot_dimension_numbers<[1], [0], [0], [1], [0, 0, 1, 1], [], []>} : vector<16x2048xbf16>, vector<2048x256xbf16>, vector<16x256xf32> -> vector<16x256xf32>
    %c0_3 = arith.constant 0 : index
    %c0_4 = arith.constant 0 : index
    %3 = vector.load %arg3[%c0_3, %c0_4] : memref<1x256xf32, #tpu.memory_space<vmem>>, vector<1x256xf32>
    %4 = vector.broadcast %3 : vector<1x256xf32> to vector<16x256xf32>
    %5 = arith.addf %2, %4 : vector<16x256xf32>
    %6 = arith.negf %5 : vector<16x256xf32>
    %7 = math.exp %6 : vector<16x256xf32>
    %cst_5 = arith.constant 1.000000e+00 : f32
    %8 = vector.broadcast %cst_5 : f32 to vector<16x256xf32>
    %9 = arith.addf %8, %7 : vector<16x256xf32>
    %10 = arith.divf %8, %9 : vector<16x256xf32>
    %c0_6 = arith.constant 0 : index
    %c0_7 = arith.constant 0 : index
    %11 = vector.load %arg4[%c0_6, %c0_7] : memref<16x256xf32, #tpu.memory_space<vmem>>, vector<16x256xf32>
    tpu.vector_store %arg4[%c0_6, %c0_7], %10 {strides = array<i32>} : memref<16x256xf32, #tpu.memory_space<vmem>>, vector<16x256xf32>,
    return
  }
  func.func @transform_0(%arg0: i32) -> (i32, i32) {
    %c0_i32 = arith.constant 0 : i32
    %c0_i32_0 = arith.constant 0 : i32
    return %arg0, %c0_i32 : i32, i32
  }
  func.func @transform_1(%arg0: i32) -> (i32, i32) {
    %c0_i32 = arith.constant 0 : i32
    %c0_i32_0 = arith.constant 0 : i32
    %c0_i32_1 = arith.constant 0 : i32
    return %c0_i32, %c0_i32_0 : i32, i32
  }
  func.func @transform_2(%arg0: i32) -> (i32, i32) {
    %c0_i32 = arith.constant 0 : i32
    %c0_i32_0 = arith.constant 0 : i32
    %c0_i32_1 = arith.constant 0 : i32
    return %c0_i32, %c0_i32_0 : i32, i32
  }
  func.func @transform_3(%arg0: i32) -> (i32, i32) {
    %c0_i32 = arith.constant 0 : i32
    %c0_i32_0 = arith.constant 0 : i32
    return %arg0, %c0_i32 : i32, i32
  }
}

</mosaic_0001>

<llo_original>
// kernel: tpu_custom_call.1
$region0: #{tpu_custom_call.1}
  #allocation0 [shape = 'u32[]', space=smem, size = 0x4, offset = 0x4, fixed_abs, tag = 'smem constant byte address 0x4 - core index']
  #allocation1 [shape = 'u32[144,128]{1,0:T(1,128)}', space=vmem, size = 0x12000, scoped, tag = 'internal scratch']
  %s0 = inlined_call_operand.hbm [shape: bf16[16,2048], index: 0, kind: input, shape index: {}]
  %s1 = inlined_call_operand.hbm [shape: bf16[2048,256], index: 1, kind: input, shape index: {}]
  %s2 = inlined_call_operand.vmem [shape: f32[1,256], index: 2, kind: input, shape index: {}]
  %s3 = inlined_call_operand.hbm [shape: f32[16,256], index: 3, kind: output, shape index: {}]
  %s4 = sld [smem:[#allocation0]]
  $region30: #{tpu_custom_call.1} parent=0
    _
  %s6 = ssub.s32 1, %s4
  %s7 = scalar_select 0, %s6, %s4
  $region1: #{tpu_custom_call.1} parent=0
    #allocation2 [shape = 'u8[65536]{0}', space=vmem, size = 0x10000, scoped, tag = 'input window, operand 0, single buffered']
    #allocation3 [shape = 's32[1]{0}', space=sflag, size = 0x4, scoped, tag = 'scoped memory for tpu_custom_call.1']
    #allocation4 [shape = 's32[1]{0}', space=sflag, size = 0x4, scoped, tag = 'scoped memory for tpu_custom_call.1']
    #allocation5 [shape = 'u8[1048576]{0}', space=vmem, size = 0x100000, scoped, tag = 'input window, operand 1, single buffered']
    #allocation6 [shape = 's32[1]{0}', space=sflag, size = 0x4, scoped, tag = 'scoped memory for tpu_custom_call.1']
    #allocation7 [shape = 'u8[16384]{0}', space=vmem, size = 0x4000, scoped, tag = 'output window, operand 0, single buffered']
    %8 = vsyncpa [#allocation3], 0
    %9 = vsyncpa [#allocation6], 0
    %10 = vsyncpa [#allocation4], 0
    // Predicated region
    $region2: #{tpu_custom_call.1} parent=1 // pred_check
      _
    $region3: #{tpu_custom_call.1} parent=1 // pred_check_branch
      %12 = sbr.rel (0) target = $region5
    $region4: #{tpu_custom_call.1} parent=1 // pred_region
      %s14 = ssub.s32 2048, 2048
      %15 = vsyncadd [#allocation3], %s14
      %s16 = sshll.u32 [#allocation2], 4
      %s17 = int_to_ptr.vmem [resolvable:$true] %s16
      %22 = dma.hbm_to_vmem [thread:$0]  %s0, 2048, %s17, [#allocation3], 1024, 1024, 64
    $region5: #{tpu_custom_call.1} parent=1 // pred_fallthru
      _
    // Predicated region
    $region6: #{tpu_custom_call.1} parent=1 // pred_check
      _
    $region7: #{tpu_custom_call.1} parent=1 // pred_check_branch
      %24 = sbr.rel (0) target = $region9
    $region8: #{tpu_custom_call.1} parent=1 // pred_region
      %s26 = ssub.s32 32768, 32768
      %27 = vsyncadd [#allocation6], %s26
      %s28 = sshll.u32 [#allocation5], 4
      %s29 = int_to_ptr.vmem [resolvable:$true] %s28
      %34 = dma.hbm_to_vmem [thread:$0]  %s1, 32768, %s29, [#allocation6], 128, 128, 8
    $region9: #{tpu_custom_call.1} parent=1 // pred_fallthru
      _
    // Predicated region
    $region10: #{tpu_custom_call.1} parent=1 // pred_check
      _
    $region11: #{tpu_custom_call.1} parent=1 // pred_check_branch
      %36 = sbr.rel (0) target = $region13
    $region12: #{tpu_custom_call.1} parent=1 // pred_region
      _
    $region13: #{tpu_custom_call.1} parent=1 // pred_fallthru
      _
    // Predicated region
    $region14: #{tpu_custom_call.1} parent=1 // pred_check
      _
    $region15: #{tpu_custom_call.1} parent=1 // pred_check_branch
      %38 = sbr.rel (0) target = $region17
    $region16: #{tpu_custom_call.1} parent=1 // pred_region
      %39 = dma.done [#allocation3], 2048
    $region17: #{tpu_custom_call.1} parent=1 // pred_fallthru
      _
    // Predicated region
    $region18: #{tpu_custom_call.1} parent=1 // pred_check
      _
    $region19: #{tpu_custom_call.1} parent=1 // pred_check_branch
      %41 = sbr.rel (0) target = $region21
    $region20: #{tpu_custom_call.1} parent=1 // pred_region
      %42 = dma.done [#allocation6], 32768
    $region21: #{tpu_custom_call.1} parent=1 // pred_fallthru
      _
    %v43 = vld [vmem:[#allocation2] sm:$0xff]
    %v44 = vld [vmem:[#allocation2 + $0x8] sm:$0xff]
    %v45 = vld [vmem:[#allocation2 + $0x10] sm:$0xff]
    %v46 = vld [vmem:[#allocation2 + $0x18] sm:$0xff]
    %v47 = vld [vmem:[#allocation2 + $0x20] sm:$0xff]
    %v48 = vld [vmem:[#allocation2 + $0x28] sm:$0xff]
    %v49 = vld [vmem:[#allocation2 + $0x30] sm:$0xff]
    %v50 = vld [vmem:[#allocation2 + $0x38] sm:$0xff]
    %v51 = vld [vmem:[#allocation2 + $0x40] sm:$0xff]
    %v52 = vld [vmem:[#allocation2 + $0x48] sm:$0xff]
    %v53 = vld [vmem:[#allocation2 + $0x50] sm:$0xff]
    %v54 = vld [vmem:[#allocation2 + $0x58] sm:$0xff]
    %v55 = vld [vmem:[#allocation2 + $0x60] sm:$0xff]
    %v56 = vld [vmem:[#allocation2 + $0x68] sm:$0xff]
    %v57 = vld [vmem:[#allocation2 + $0x70] sm:$0xff]
    %v58 = vld [vmem:[#allocation2 + $0x78] sm:$0xff]
    %v59 = vld [vmem:[#allocation5] sm:$0xff]
    %v60 = vld [vmem:[#allocation5 + $0x8] sm:$0xff]
    %v61 = vld [vmem:[#allocation5 + $0x10] sm:$0xff]
    %v62 = vld [vmem:[#allocation5 + $0x18] sm:$0xff]
    %v63 = vld [vmem:[#allocation5 + $0x20] sm:$0xff]
    %v64 = vld [vmem:[#allocation5 + $0x28] sm:$0xff]
    %v65 = vld [vmem:[#allocation5 + $0x30] sm:$0xff]
    %v66 = vld [vmem:[#allocation5 + $0x38] sm:$0xff]
    %v67 = vld [vmem:[#allocation5 + $0x40] sm:$0xff]
    %v68 = vld [vmem:[#allocation5 + $0x48] sm:$0xff]
    %v69 = vld [vmem:[#allocation5 + $0x50] sm:$0xff]
    %v70 = vld [vmem:[#allocation5 + $0x58] sm:$0xff]
    %v71 = vld [vmem:[#allocation5 + $0x60] sm:$0xff]
    %v72 = vld [vmem:[#allocation5 + $0x68] sm:$0xff]
    %v73 = vld [vmem:[#allocation5 + $0x70] sm:$0xff]
    %v74 = vld [vmem:[#allocation5 + $0x78] sm:$0xff]
    %v75 = vld [vmem:[#allocation5 + $0x80] sm:$0xff]
    %v76 = vld [vmem:[#allocation5 + $0x88] sm:$0xff]
    %v77 = vld [vmem:[#allocation5 + $0x90] sm:$0xff]
    %v78 = vld [vmem:[#allocation5 + $0x98] sm:$0xff]
    %v79 = vld [vmem:[#allocation5 + $0xa0] sm:$0xff]
    %v80 = vld [vmem:[#allocation5 + $0xa8] sm:$0xff]
    %v81 = vld [vmem:[#allocation5 + $0xb0] sm:$0xff]
    %v82 = vld [vmem:[#allocation5 + $0xb8] sm:$0xff]
    %v83 = vld [vmem:[#allocation5 + $0xc0] sm:$0xff]
    %v84 = vld [vmem:[#allocation5 + $0xc8] sm:$0xff]
    %v85 = vld [vmem:[#allocation5 + $0xd0] sm:$0xff]
    %v86 = vld [vmem:[#allocation5 + $0xd8] sm:$0xff]
    %v87 = vld [vmem:[#allocation5 + $0xe0] sm:$0xff]
    %v88 = vld [vmem:[#allocation5 + $0xe8] sm:$0xff]
    %v89 = vld [vmem:[#allocation5 + $0xf0] sm:$0xff]
    %v90 = vld [vmem:[#allocation5 + $0xf8] sm:$0xff]
    %v91 = vld [vmem:[#allocation5 + $0x100] sm:$0xff]
    %v92 = vld [vmem:[#allocation5 + $0x108] sm:$0xff]
    %v93 = vld [vmem:[#allocation5 + $0x110] sm:$0xff]
    %v94 = vld [vmem:[#allocation5 + $0x118] sm:$0xff]
    %v95 = vld [vmem:[#allocation5 + $0x120] sm:$0xff]
    %v96 = vld [vmem:[#allocation5 + $0x128] sm:$0xff]
    %v97 = vld [vmem:[#allocation5 + $0x130] sm:$0xff]
    %v98 = vld [vmem:[#allocation5 + $0x138] sm:$0xff]
    %v99 = vld [vmem:[#allocation5 + $0x140] sm:$0xff]
    %v100 = vld [vmem:[#allocation5 + $0x148] sm:$0xff]
    %v101 = vld [vmem:[#allocation5 + $0x150] sm:$0xff]
    %v102 = vld [vmem:[#allocation5 + $0x158] sm:$0xff]
    %v103 = vld [vmem:[#allocation5 + $0x160] sm:$0xff]
    %v104 = vld [vmem:[#allocation5 + $0x168] sm:$0xff]
    %v105 = vld [vmem:[#allocation5 + $0x170] sm:$0xff]
    %v106 = vld [vmem:[#allocation5 + $0x178] sm:$0xff]
    %v107 = vld [vmem:[#allocation5 + $0x180] sm:$0xff]
    %v108 = vld [vmem:[#allocation5 + $0x188] sm:$0xff]
    %v109 = vld [vmem:[#allocation5 + $0x190] sm:$0xff]
    %v110 = vld [vmem:[#allocation5 + $0x198] sm:$0xff]
    %v111 = vld [vmem:[#allocation5 + $0x1a0] sm:$0xff]
    %v112 = vld [vmem:[#allocation5 + $0x1a8] sm:$0xff]
    %v113 = vld [vmem:[#allocation5 + $0x1b0] sm:$0xff]
    %v114 = vld [vmem:[#allocation5 + $0x1b8] sm:$0xff]
    %v115 = vld [vmem:[#allocation5 + $0x1c0] sm:$0xff]
    %v116 = vld [vmem:[#allocation5 + $0x1c8] sm:$0xff]
    %v117 = vld [vmem:[#allocation5 + $0x1d0] sm:$0xff]
    %v118 = vld [vmem:[#allocation5 + $0x1d8] sm:$0xff]
    %v119 = vld [vmem:[#allocation5 + $0x1e0] sm:$0xff]
    %v120 = vld [vmem:[#allocation5 + $0x1e8] sm:$0xff]
    %v121 = vld [vmem:[#allocation5 + $0x1f0] sm:$0xff]
    %v122 = vld [vmem:[#allocation5 + $0x1f8] sm:$0xff]
    %v123 = vld [vmem:[#allocation5 + $0x200] sm:$0xff]
    %v124 = vld [vmem:[#allocation5 + $0x208] sm:$0xff]
    %v125 = vld [vmem:[#allocation5 + $0x210] sm:$0xff]
    %v126 = vld [vmem:[#allocation5 + $0x218] sm:$0xff]
    %v127 = vld [vmem:[#allocation5 + $0x220] sm:$0xff]
    %v128 = vld [vmem:[#allocation5 + $0x228] sm:$0xff]
    %v129 = vld [vmem:[#allocation5 + $0x230] sm:$0xff]
    %v130 = vld [vmem:[#allocation5 + $0x238] sm:$0xff]
    %v131 = vld [vmem:[#allocation5 + $0x240] sm:$0xff]
    %v132 = vld [vmem:[#allocation5 + $0x248] sm:$0xff]
    %v133 = vld [vmem:[#allocation5 + $0x250] sm:$0xff]
    %v134 = vld [vmem:[#allocation5 + $0x258] sm:$0xff]
    %v135 = vld [vmem:[#allocation5 + $0x260] sm:$0xff]
    %v136 = vld [vmem:[#allocation5 + $0x268] sm:$0xff]
    %v137 = vld [vmem:[#allocation5 + $0x270] sm:$0xff]
    %v138 = vld [vmem:[#allocation5 + $0x278] sm:$0xff]
    %v139 = vld [vmem:[#allocation5 + $0x280] sm:$0xff]
    %v140 = vld [vmem:[#allocation5 + $0x288] sm:$0xff]
    %v141 = vld [vmem:[#allocation5 + $0x290] sm:$0xff]
    %v142 = vld [vmem:[#allocation5 + $0x298] sm:$0xff]
    %v143 = vld [vmem:[#allocation5 + $0x2a0] sm:$0xff]
    %v144 = vld [vmem:[#allocation5 + $0x2a8] sm:$0xff]
    %v145 = vld [vmem:[#allocation5 + $0x2b0] sm:$0xff]
    %v146 = vld [vmem:[#allocation5 + $0x2b8] sm:$0xff]
    %v147 = vld [vmem:[#allocation5 + $0x2c0] sm:$0xff]
    %v148 = vld [vmem:[#allocation5 + $0x2c8] sm:$0xff]
    %v149 = vld [vmem:[#allocation5 + $0x2d0] sm:$0xff]
    %v150 = vld [vmem:[#allocation5 + $0x2d8] sm:$0xff]
    %v151 = vld [vmem:[#allocation5 + $0x2e0] sm:$0xff]
    %v152 = vld [vmem:[#allocation5 + $0x2e8] sm:$0xff]
    %v153 = vld [vmem:[#allocation5 + $0x2f0] sm:$0xff]
    %v154 = vld [vmem:[#allocation5 + $0x2f8] sm:$0xff]
    %v155 = vld [vmem:[#allocation5 + $0x300] sm:$0xff]
    %v156 = vld [vmem:[#allocation5 + $0x308] sm:$0xff]
    %v157 = vld [vmem:[#allocation5 + $0x310] sm:$0xff]
    %v158 = vld [vmem:[#allocation5 + $0x318] sm:$0xff]
    %v159 = vld [vmem:[#allocation5 + $0x320] sm:$0xff]
    %v160 = vld [vmem:[#allocation5 + $0x328] sm:$0xff]
    %v161 = vld [vmem:[#allocation5 + $0x330] sm:$0xff]
    %v162 = vld [vmem:[#allocation5 + $0x338] sm:$0xff]
    %v163 = vld [vmem:[#allocation5 + $0x340] sm:$0xff]
    %v164 = vld [vmem:[#allocation5 + $0x348] sm:$0xff]
    %v165 = vld [vmem:[#allocation5 + $0x350] sm:$0xff]
    %v166 = vld [vmem:[#allocation5 + $0x358] sm:$0xff]
    %v167 = vld [vmem:[#allocation5 + $0x360] sm:$0xff]
    %v168 = vld [vmem:[#allocation5 + $0x368] sm:$0xff]
    %v169 = vld [vmem:[#allocation5 + $0x370] sm:$0xff]
    %v170 = vld [vmem:[#allocation5 + $0x378] sm:$0xff]
    %v171 = vld [vmem:[#allocation5 + $0x380] sm:$0xff]
    %v172 = vld [vmem:[#allocation5 + $0x388] sm:$0xff]
    %v173 = vld [vmem:[#allocation5 + $0x390] sm:$0xff]
    %v174 = vld [vmem:[#allocation5 + $0x398] sm:$0xff]
    %v175 = vld [vmem:[#allocation5 + $0x3a0] sm:$0xff]
    %v176 = vld [vmem:[#allocation5 + $0x3a8] sm:$0xff]
    %v177 = vld [vmem:[#allocation5 + $0x3b0] sm:$0xff]
    %v178 = vld [vmem:[#allocation5 + $0x3b8] sm:$0xff]
    %v179 = vld [vmem:[#allocation5 + $0x3c0] sm:$0xff]
    %v180 = vld [vmem:[#allocation5 + $0x3c8] sm:$0xff]
    %v181 = vld [vmem:[#allocation5 + $0x3d0] sm:$0xff]
    %v182 = vld [vmem:[#allocation5 + $0x3d8] sm:$0xff]
    %v183 = vld [vmem:[#allocation5 + $0x3e0] sm:$0xff]
    %v184 = vld [vmem:[#allocation5 + $0x3e8] sm:$0xff]
    %v185 = vld [vmem:[#allocation5 + $0x3f0] sm:$0xff]
    %v186 = vld [vmem:[#allocation5 + $0x3f8] sm:$0xff]
    %v187 = vld [vmem:[#allocation5 + $0x400] sm:$0xff]
    %v188 = vld [vmem:[#allocation5 + $0x408] sm:$0xff]
    %v189 = vld [vmem:[#allocation5 + $0x410] sm:$0xff]
    %v190 = vld [vmem:[#allocation5 + $0x418] sm:$0xff]
    %v191 = vld [vmem:[#allocation5 + $0x420] sm:$0xff]
    %v192 = vld [vmem:[#allocation5 + $0x428] sm:$0xff]
    %v193 = vld [vmem:[#allocation5 + $0x430] sm:$0xff]
    %v194 = vld [vmem:[#allocation5 + $0x438] sm:$0xff]
    %v195 = vld [vmem:[#allocation5 + $0x440] sm:$0xff]
    %v196 = vld [vmem:[#allocation5 + $0x448] sm:$0xff]
    %v197 = vld [vmem:[#allocation5 + $0x450] sm:$0xff]
    %v198 = vld [vmem:[#allocation5 + $0x458] sm:$0xff]
    %v199 = vld [vmem:[#allocation5 + $0x460] sm:$0xff]
    %v200 = vld [vmem:[#allocation5 + $0x468] sm:$0xff]
    %v201 = vld [vmem:[#allocation5 + $0x470] sm:$0xff]
    %v202 = vld [vmem:[#allocation5 + $0x478] sm:$0xff]
    %v203 = vld [vmem:[#allocation5 + $0x480] sm:$0xff]
    %v204 = vld [vmem:[#allocation5 + $0x488] sm:$0xff]
    %v205 = vld [vmem:[#allocation5 + $0x490] sm:$0xff]
    %v206 = vld [vmem:[#allocation5 + $0x498] sm:$0xff]
    %v207 = vld [vmem:[#allocation5 + $0x4a0] sm:$0xff]
    %v208 = vld [vmem:[#allocation5 + $0x4a8] sm:$0xff]
    %v209 = vld [vmem:[#allocation5 + $0x4b0] sm:$0xff]
    %v210 = vld [vmem:[#allocation5 + $0x4b8] sm:$0xff]
    %v211 = vld [vmem:[#allocation5 + $0x4c0] sm:$0xff]
    %v212 = vld [vmem:[#allocation5 + $0x4c8] sm:$0xff]
    %v213 = vld [vmem:[#allocation5 + $0x4d0] sm:$0xff]
    %v214 = vld [vmem:[#allocation5 + $0x4d8] sm:$0xff]
    %v215 = vld [vmem:[#allocation5 + $0x4e0] sm:$0xff]
    %v216 = vld [vmem:[#allocation5 + $0x4e8] sm:$0xff]
    %v217 = vld [vmem:[#allocation5 + $0x4f0] sm:$0xff]
    %v218 = vld [vmem:[#allocation5 + $0x4f8] sm:$0xff]
    %v219 = vld [vmem:[#allocation5 + $0x500] sm:$0xff]
    %v220 = vld [vmem:[#allocation5 + $0x508] sm:$0xff]
    %v221 = vld [vmem:[#allocation5 + $0x510] sm:$0xff]
    %v222 = vld [vmem:[#allocation5 + $0x518] sm:$0xff]
    %v223 = vld [vmem:[#allocation5 + $0x520] sm:$0xff]
    %v224 = vld [vmem:[#allocation5 + $0x528] sm:$0xff]
    %v225 = vld [vmem:[#allocation5 + $0x530] sm:$0xff]
    %v226 = vld [vmem:[#allocation5 + $0x538] sm:$0xff]
    %v227 = vld [vmem:[#allocation5 + $0x540] sm:$0xff]
    %v228 = vld [vmem:[#allocation5 + $0x548] sm:$0xff]
    %v229 = vld [vmem:[#allocation5 + $0x550] sm:$0xff]
    %v230 = vld [vmem:[#allocation5 + $0x558] sm:$0xff]
    %v231 = vld [vmem:[#allocation5 + $0x560] sm:$0xff]
    %v232 = vld [vmem:[#allocation5 + $0x568] sm:$0xff]
    %v233 = vld [vmem:[#allocation5 + $0x570] sm:$0xff]
    %v234 = vld [vmem:[#allocation5 + $0x578] sm:$0xff]
    %v235 = vld [vmem:[#allocation5 + $0x580] sm:$0xff]
    %v236 = vld [vmem:[#allocation5 + $0x588] sm:$0xff]
    %v237 = vld [vmem:[#allocation5 + $0x590] sm:$0xff]
    %v238 = vld [vmem:[#allocation5 + $0x598] sm:$0xff]
    %v239 = vld [vmem:[#allocation5 + $0x5a0] sm:$0xff]
    %v240 = vld [vmem:[#allocation5 + $0x5a8] sm:$0xff]
    %v241 = vld [vmem:[#allocation5 + $0x5b0] sm:$0xff]
    %v242 = vld [vmem:[#allocation5 + $0x5b8] sm:$0xff]
    %v243 = vld [vmem:[#allocation5 + $0x5c0] sm:$0xff]
    %v244 = vld [vmem:[#allocation5 + $0x5c8] sm:$0xff]
    %v245 = vld [vmem:[#allocation5 + $0x5d0] sm:$0xff]
    %v246 = vld [vmem:[#allocation5 + $0x5d8] sm:$0xff]
    %v247 = vld [vmem:[#allocation5 + $0x5e0] sm:$0xff]
    %v248 = vld [vmem:[#allocation5 + $0x5e8] sm:$0xff]
    %v249 = vld [vmem:[#allocation5 + $0x5f0] sm:$0xff]
    %v250 = vld [vmem:[#allocation5 + $0x5f8] sm:$0xff]
    %v251 = vld [vmem:[#allocation5 + $0x600] sm:$0xff]
    %v252 = vld [vmem:[#allocation5 + $0x608] sm:$0xff]
    %v253 = vld [vmem:[#allocation5 + $0x610] sm:$0xff]
    %v254 = vld [vmem:[#allocation5 + $0x618] sm:$0xff]
    %v255 = vld [vmem:[#allocation5 + $0x620] sm:$0xff]
    %v256 = vld [vmem:[#allocation5 + $0x628] sm:$0xff]
    %v257 = vld [vmem:[#allocation5 + $0x630] sm:$0xff]
    %v258 = vld [vmem:[#allocation5 + $0x638] sm:$0xff]
    %v259 = vld [vmem:[#allocation5 + $0x640] sm:$0xff]
    %v260 = vld [vmem:[#allocation5 + $0x648] sm:$0xff]
    %v261 = vld [vmem:[#allocation5 + $0x650] sm:$0xff]
    %v262 = vld [vmem:[#allocation5 + $0x658] sm:$0xff]
    %v263 = vld [vmem:[#allocation5 + $0x660] sm:$0xff]
    %v264 = vld [vmem:[#allocation5 + $0x668] sm:$0xff]
    %v265 = vld [vmem:[#allocation5 + $0x670] sm:$0xff]
    %v266 = vld [vmem:[#allocation5 + $0x678] sm:$0xff]
    %v267 = vld [vmem:[#allocation5 + $0x680] sm:$0xff]
    %v268 = vld [vmem:[#allocation5 + $0x688] sm:$0xff]
    %v269 = vld [vmem:[#allocation5 + $0x690] sm:$0xff]
    %v270 = vld [vmem:[#allocation5 + $0x698] sm:$0xff]
    %v271 = vld [vmem:[#allocation5 + $0x6a0] sm:$0xff]
    %v272 = vld [vmem:[#allocation5 + $0x6a8] sm:$0xff]
    %v273 = vld [vmem:[#allocation5 + $0x6b0] sm:$0xff]
    %v274 = vld [vmem:[#allocation5 + $0x6b8] sm:$0xff]
    %v275 = vld [vmem:[#allocation5 + $0x6c0] sm:$0xff]
    %v276 = vld [vmem:[#allocation5 + $0x6c8] sm:$0xff]
    %v277 = vld [vmem:[#allocation5 + $0x6d0] sm:$0xff]
    %v278 = vld [vmem:[#allocation5 + $0x6d8] sm:$0xff]
    %v279 = vld [vmem:[#allocation5 + $0x6e0] sm:$0xff]
    %v280 = vld [vmem:[#allocation5 + $0x6e8] sm:$0xff]
    %v281 = vld [vmem:[#allocation5 + $0x6f0] sm:$0xff]
    %v282 = vld [vmem:[#allocation5 + $0x6f8] sm:$0xff]
    %v283 = vld [vmem:[#allocation5 + $0x700] sm:$0xff]
    %v284 = vld [vmem:[#allocation5 + $0x708] sm:$0xff]
    %v285 = vld [vmem:[#allocation5 + $0x710] sm:$0xff]
    %v286 = vld [vmem:[#allocation5 + $0x718] sm:$0xff]
    %v287 = vld [vmem:[#allocation5 + $0x720] sm:$0xff]
    %v288 = vld [vmem:[#allocation5 + $0x728] sm:$0xff]
    %v289 = vld [vmem:[#allocation5 + $0x730] sm:$0xff]
    %v290 = vld [vmem:[#allocation5 + $0x738] sm:$0xff]
    %v291 = vld [vmem:[#allocation5 + $0x740] sm:$0xff]
    %v292 = vld [vmem:[#allocation5 + $0x748] sm:$0xff]
    %v293 = vld [vmem:[#allocation5 + $0x750] sm:$0xff]
    %v294 = vld [vmem:[#allocation5 + $0x758] sm:$0xff]
    %v295 = vld [vmem:[#allocation5 + $0x760] sm:$0xff]
    %v296 = vld [vmem:[#allocation5 + $0x768] sm:$0xff]
    %v297 = vld [vmem:[#allocation5 + $0x770] sm:$0xff]
    %v298 = vld [vmem:[#allocation5 + $0x778] sm:$0xff]
    %v299 = vld [vmem:[#allocation5 + $0x780] sm:$0xff]
    %v300 = vld [vmem:[#allocation5 + $0x788] sm:$0xff]
    %v301 = vld [vmem:[#allocation5 + $0x790] sm:$0xff]
    %v302 = vld [vmem:[#allocation5 + $0x798] sm:$0xff]
    %v303 = vld [vmem:[#allocation5 + $0x7a0] sm:$0xff]
    %v304 = vld [vmem:[#allocation5 + $0x7a8] sm:$0xff]
    %v305 = vld [vmem:[#allocation5 + $0x7b0] sm:$0xff]
    %v306 = vld [vmem:[#allocation5 + $0x7b8] sm:$0xff]
    %v307 = vld [vmem:[#allocation5 + $0x7c0] sm:$0xff]
    %v308 = vld [vmem:[#allocation5 + $0x7c8] sm:$0xff]
    %v309 = vld [vmem:[#allocation5 + $0x7d0] sm:$0xff]
    %v310 = vld [vmem:[#allocation5 + $0x7d8] sm:$0xff]
    %v311 = vld [vmem:[#allocation5 + $0x7e0] sm:$0xff]
    %v312 = vld [vmem:[#allocation5 + $0x7e8] sm:$0xff]
    %v313 = vld [vmem:[#allocation5 + $0x7f0] sm:$0xff]
    %v314 = vld [vmem:[#allocation5 + $0x7f8] sm:$0xff]
    %v315 = vld [vmem:[%s2] sm:$0x3]
    %v317 = vlaneseq
    %v318 = vshrl.u32 %v317, 7
    %v319 = vsub.s32 0, %v318
    %v320 = vrot.slane %v315, %v319
    %v321 = vlaneseq
    %v322 = vshrl.u32 %v321, 7
    %v323 = vsub.s32 1, %v322
    %v324 = vrot.slane %v315, %v323
    %v343 = vunpack.c.l.b16 %v43
    %v344 = vunpack.c.h.b16 %v43
    %v345 = vunpack.c.l.b16 %v44
    %v346 = vunpack.c.h.b16 %v44
    %v347 = vunpack.c.l.b16 %v45
    %v348 = vunpack.c.h.b16 %v45
    %v349 = vunpack.c.l.b16 %v46
    %v350 = vunpack.c.h.b16 %v46
    %v351 = vunpack.c.l.b16 %v47
    %v352 = vunpack.c.h.b16 %v47
    %v353 = vunpack.c.l.b16 %v48
    %v354 = vunpack.c.h.b16 %v48
    %v355 = vunpack.c.l.b16 %v49
    %v356 = vunpack.c.h.b16 %v49
    %v357 = vunpack.c.l.b16 %v50
    %v358 = vunpack.c.h.b16 %v50
    %v359 = vunpack.c.l.b16 %v51
    %v360 = vunpack.c.h.b16 %v51
    %v361 = vunpack.c.l.b16 %v52
    %v362 = vunpack.c.h.b16 %v52
    %v363 = vunpack.c.l.b16 %v53
    %v364 = vunpack.c.h.b16 %v53
    %v365 = vunpack.c.l.b16 %v54
    %v366 = vunpack.c.h.b16 %v54
    %v367 = vunpack.c.l.b16 %v55
    %v368 = vunpack.c.h.b16 %v55
    %v369 = vunpack.c.l.b16 %v56
    %v370 = vunpack.c.h.b16 %v56
    %v371 = vunpack.c.l.b16 %v57
    %v372 = vunpack.c.h.b16 %v57
    %v373 = vunpack.c.l.b16 %v58
    %v374 = vunpack.c.h.b16 %v58
    %v375 = vpack.c.b16 %v359, %v343
    %v376 = vpack.c.b16 %v360, %v344
    %v377 = vpack.c.b16 %v361, %v345
    %v378 = vpack.c.b16 %v362, %v346
    %v379 = vpack.c.b16 %v363, %v347
    %v380 = vpack.c.b16 %v364, %v348
    %v381 = vpack.c.b16 %v365, %v349
    %v382 = vpack.c.b16 %v366, %v350
    %v383 = vpack.c.b16 %v367, %v351
    %v384 = vpack.c.b16 %v368, %v352
    %v385 = vpack.c.b16 %v369, %v353
    %v386 = vpack.c.b16 %v370, %v354
    %v387 = vpack.c.b16 %v371, %v355
    %v388 = vpack.c.b16 %v372, %v356
    %v389 = vpack.c.b16 %v373, %v357
    %v390 = vpack.c.b16 %v374, %v358
    %v663 = vunpack.c.l.b16 %v59
    %v664 = vunpack.c.h.b16 %v59
    %v665 = vunpack.c.l.b16 %v60
    %v666 = vunpack.c.h.b16 %v60
    %v667 = vunpack.c.l.b16 %v61
    %v668 = vunpack.c.h.b16 %v61
    %v669 = vunpack.c.l.b16 %v62
    %v670 = vunpack.c.h.b16 %v62
    %v671 = vunpack.c.l.b16 %v63
    %v672 = vunpack.c.h.b16 %v63
    %v673 = vunpack.c.l.b16 %v64
    %v674 = vunpack.c.h.b16 %v64
    %v675 = vunpack.c.l.b16 %v65
    %v676 = vunpack.c.h.b16 %v65
    %v677 = vunpack.c.l.b16 %v66
    %v678 = vunpack.c.h.b16 %v66
    %v679 = vunpack.c.l.b16 %v67
    %v680 = vunpack.c.h.b16 %v67
    %v681 = vunpack.c.l.b16 %v68
    %v682 = vunpack.c.h.b16 %v68
    %v683 = vunpack.c.l.b16 %v69
    %v684 = vunpack.c.h.b16 %v69
    %v685 = vunpack.c.l.b16 %v70
    %v686 = vunpack.c.h.b16 %v70
    %v687 = vunpack.c.l.b16 %v71
    %v688 = vunpack.c.h.b16 %v71
    %v689 = vunpack.c.l.b16 %v72
    %v690 = vunpack.c.h.b16 %v72
    %v691 = vunpack.c.l.b16 %v73
    %v692 = vunpack.c.h.b16 %v73
    %v693 = vunpack.c.l.b16 %v74
    %v694 = vunpack.c.h.b16 %v74
    %v695 = vunpack.c.l.b16 %v75
    %v696 = vunpack.c.h.b16 %v75
    %v697 = vunpack.c.l.b16 %v76
    %v698 = vunpack.c.h.b16 %v76
    %v699 = vunpack.c.l.b16 %v77
    %v700 = vunpack.c.h.b16 %v77
    %v701 = vunpack.c.l.b16 %v78
    %v702 = vunpack.c.h.b16 %v78
    %v703 = vunpack.c.l.b16 %v79
    %v704 = vunpack.c.h.b16 %v79
    %v705 = vunpack.c.l.b16 %v80
    %v706 = vunpack.c.h.b16 %v80
    %v707 = vunpack.c.l.b16 %v81
    %v708 = vunpack.c.h.b16 %v81
    %v709 = vunpack.c.l.b16 %v82
    %v710 = vunpack.c.h.b16 %v82
    %v711 = vunpack.c.l.b16 %v83
    %v712 = vunpack.c.h.b16 %v83
    %v713 = vunpack.c.l.b16 %v84
    %v714 = vunpack.c.h.b16 %v84
    %v715 = vunpack.c.l.b16 %v85
    %v716 = vunpack.c.h.b16 %v85
    %v717 = vunpack.c.l.b16 %v86
    %v718 = vunpack.c.h.b16 %v86
    %v719 = vunpack.c.l.b16 %v87
    %v720 = vunpack.c.h.b16 %v87
    %v721 = vunpack.c.l.b16 %v88
    %v722 = vunpack.c.h.b16 %v88
    %v723 = vunpack.c.l.b16 %v89
    %v724 = vunpack.c.h.b16 %v89
    %v725 = vunpack.c.l.b16 %v90
    %v726 = vunpack.c.h.b16 %v90
    %v727 = vunpack.c.l.b16 %v91
    %v728 = vunpack.c.h.b16 %v91
    %v729 = vunpack.c.l.b16 %v92
    %v730 = vunpack.c.h.b16 %v92
    %v731 = vunpack.c.l.b16 %v93
    %v732 = vunpack.c.h.b16 %v93
    %v733 = vunpack.c.l.b16 %v94
    %v734 = vunpack.c.h.b16 %v94
    %v735 = vunpack.c.l.b16 %v95
    %v736 = vunpack.c.h.b16 %v95
    %v737 = vunpack.c.l.b16 %v96
    %v738 = vunpack.c.h.b16 %v96
    %v739 = vunpack.c.l.b16 %v97
    %v740 = vunpack.c.h.b16 %v97
    %v741 = vunpack.c.l.b16 %v98
    %v742 = vunpack.c.h.b16 %v98
    %v743 = vunpack.c.l.b16 %v99
    %v744 = vunpack.c.h.b16 %v99
    %v745 = vunpack.c.l.b16 %v100
    %v746 = vunpack.c.h.b16 %v100
    %v747 = vunpack.c.l.b16 %v101
    %v748 = vunpack.c.h.b16 %v101
    %v749 = vunpack.c.l.b16 %v102
    %v750 = vunpack.c.h.b16 %v102
    %v751 = vunpack.c.l.b16 %v103
    %v752 = vunpack.c.h.b16 %v103
    %v753 = vunpack.c.l.b16 %v104
    %v754 = vunpack.c.h.b16 %v104
    %v755 = vunpack.c.l.b16 %v105
    %v756 = vunpack.c.h.b16 %v105
    %v757 = vunpack.c.l.b16 %v106
    %v758 = vunpack.c.h.b16 %v106
    %v759 = vunpack.c.l.b16 %v107
    %v760 = vunpack.c.h.b16 %v107
    %v761 = vunpack.c.l.b16 %v108
    %v762 = vunpack.c.h.b16 %v108
    %v763 = vunpack.c.l.b16 %v109
    %v764 = vunpack.c.h.b16 %v109
    %v765 = vunpack.c.l.b16 %v110
    %v766 = vunpack.c.h.b16 %v110
    %v767 = vunpack.c.l.b16 %v111
    %v768 = vunpack.c.h.b16 %v111
    %v769 = vunpack.c.l.b16 %v112
    %v770 = vunpack.c.h.b16 %v112
    %v771 = vunpack.c.l.b16 %v113
    %v772 = vunpack.c.h.b16 %v113
    %v773 = vunpack.c.l.b16 %v114
    %v774 = vunpack.c.h.b16 %v114
    %v775 = vunpack.c.l.b16 %v115
    %v776 = vunpack.c.h.b16 %v115
    %v777 = vunpack.c.l.b16 %v116
    %v778 = vunpack.c.h.b16 %v116
    %v779 = vunpack.c.l.b16 %v117
    %v780 = vunpack.c.h.b16 %v117
    %v781 = vunpack.c.l.b16 %v118
    %v782 = vunpack.c.h.b16 %v118
    %v783 = vunpack.c.l.b16 %v119
    %v784 = vunpack.c.h.b16 %v119
    %v785 = vunpack.c.l.b16 %v120
    %v786 = vunpack.c.h.b16 %v120
    %v787 = vunpack.c.l.b16 %v121
    %v788 = vunpack.c.h.b16 %v121
    %v789 = vunpack.c.l.b16 %v122
    %v790 = vunpack.c.h.b16 %v122
    %v791 = vunpack.c.l.b16 %v123
    %v792 = vunpack.c.h.b16 %v123
    %v793 = vunpack.c.l.b16 %v124
    %v794 = vunpack.c.h.b16 %v124
    %v795 = vunpack.c.l.b16 %v125
    %v796 = vunpack.c.h.b16 %v125
    %v797 = vunpack.c.l.b16 %v126
    %v798 = vunpack.c.h.b16 %v126
    %v799 = vunpack.c.l.b16 %v127
    %v800 = vunpack.c.h.b16 %v127
    %v801 = vunpack.c.l.b16 %v128
    %v802 = vunpack.c.h.b16 %v128
    %v803 = vunpack.c.l.b16 %v129
    %v804 = vunpack.c.h.b16 %v129
    %v805 = vunpack.c.l.b16 %v130
    %v806 = vunpack.c.h.b16 %v130
    %v807 = vunpack.c.l.b16 %v131
    %v808 = vunpack.c.h.b16 %v131
    %v809 = vunpack.c.l.b16 %v132
    %v810 = vunpack.c.h.b16 %v132
    %v811 = vunpack.c.l.b16 %v133
    %v812 = vunpack.c.h.b16 %v133
    %v813 = vunpack.c.l.b16 %v134
    %v814 = vunpack.c.h.b16 %v134
    %v815 = vunpack.c.l.b16 %v135
    %v816 = vunpack.c.h.b16 %v135
    %v817 = vunpack.c.l.b16 %v136
    %v818 = vunpack.c.h.b16 %v136
    %v819 = vunpack.c.l.b16 %v137
    %v820 = vunpack.c.h.b16 %v137
    %v821 = vunpack.c.l.b16 %v138
    %v822 = vunpack.c.h.b16 %v138
    %v823 = vunpack.c.l.b16 %v139
    %v824 = vunpack.c.h.b16 %v139
    %v825 = vunpack.c.l.b16 %v140
    %v826 = vunpack.c.h.b16 %v140
    %v827 = vunpack.c.l.b16 %v141
    %v828 = vunpack.c.h.b16 %v141
    %v829 = vunpack.c.l.b16 %v142
    %v830 = vunpack.c.h.b16 %v142
    %v831 = vunpack.c.l.b16 %v143
    %v832 = vunpack.c.h.b16 %v143
    %v833 = vunpack.c.l.b16 %v144
    %v834 = vunpack.c.h.b16 %v144
    %v835 = vunpack.c.l.b16 %v145
    %v836 = vunpack.c.h.b16 %v145
    %v837 = vunpack.c.l.b16 %v146
    %v838 = vunpack.c.h.b16 %v146
    %v839 = vunpack.c.l.b16 %v147
    %v840 = vunpack.c.h.b16 %v147
    %v841 = vunpack.c.l.b16 %v148
    %v842 = vunpack.c.h.b16 %v148
    %v843 = vunpack.c.l.b16 %v149
    %v844 = vunpack.c.h.b16 %v149
    %v845 = vunpack.c.l.b16 %v150
    %v846 = vunpack.c.h.b16 %v150
    %v847 = vunpack.c.l.b16 %v151
    %v848 = vunpack.c.h.b16 %v151
    %v849 = vunpack.c.l.b16 %v152
    %v850 = vunpack.c.h.b16 %v152
    %v851 = vunpack.c.l.b16 %v153
    %v852 = vunpack.c.h.b16 %v153
    %v853 = vunpack.c.l.b16 %v154
    %v854 = vunpack.c.h.b16 %v154
    %v855 = vunpack.c.l.b16 %v155
    %v856 = vunpack.c.h.b16 %v155
    %v857 = vunpack.c.l.b16 %v156
    %v858 = vunpack.c.h.b16 %v156
    %v859 = vunpack.c.l.b16 %v157
    %v860 = vunpack.c.h.b16 %v157
    %v861 = vunpack.c.l.b16 %v158
    %v862 = vunpack.c.h.b16 %v158
    %v863 = vunpack.c.l.b16 %v159
    %v864 = vunpack.c.h.b16 %v159
    %v865 = vunpack.c.l.b16 %v160
    %v866 = vunpack.c.h.b16 %v160
    %v867 = vunpack.c.l.b16 %v161
    %v868 = vunpack.c.h.b16 %v161
    %v869 = vunpack.c.l.b16 %v162
    %v870 = vunpack.c.h.b16 %v162
    %v871 = vunpack.c.l.b16 %v163
    %v872 = vunpack.c.h.b16 %v163
    %v873 = vunpack.c.l.b16 %v164
    %v874 = vunpack.c.h.b16 %v164
    %v875 = vunpack.c.l.b16 %v165
    %v876 = vunpack.c.h.b16 %v165
    %v877 = vunpack.c.l.b16 %v166
    %v878 = vunpack.c.h.b16 %v166
    %v879 = vunpack.c.l.b16 %v167
    %v880 = vunpack.c.h.b16 %v167
    %v881 = vunpack.c.l.b16 %v168
    %v882 = vunpack.c.h.b16 %v168
    %v883 = vunpack.c.l.b16 %v169
    %v884 = vunpack.c.h.b16 %v169
    %v885 = vunpack.c.l.b16 %v170
    %v886 = vunpack.c.h.b16 %v170
    %v887 = vunpack.c.l.b16 %v171
    %v888 = vunpack.c.h.b16 %v171
    %v889 = vunpack.c.l.b16 %v172
    %v890 = vunpack.c.h.b16 %v172
    %v891 = vunpack.c.l.b16 %v173
    %v892 = vunpack.c.h.b16 %v173
    %v893 = vunpack.c.l.b16 %v174
    %v894 = vunpack.c.h.b16 %v174
    %v895 = vunpack.c.l.b16 %v175
    %v896 = vunpack.c.h.b16 %v175
    %v897 = vunpack.c.l.b16 %v176
    %v898 = vunpack.c.h.b16 %v176
    %v899 = vunpack.c.l.b16 %v177
    %v900 = vunpack.c.h.b16 %v177
    %v901 = vunpack.c.l.b16 %v178
    %v902 = vunpack.c.h.b16 %v178
    %v903 = vunpack.c.l.b16 %v179
    %v904 = vunpack.c.h.b16 %v179
    %v905 = vunpack.c.l.b16 %v180
    %v906 = vunpack.c.h.b16 %v180
    %v907 = vunpack.c.l.b16 %v181
    %v908 = vunpack.c.h.b16 %v181
    %v909 = vunpack.c.l.b16 %v182
    %v910 = vunpack.c.h.b16 %v182
    %v911 = vunpack.c.l.b16 %v183
    %v912 = vunpack.c.h.b16 %v183
    %v913 = vunpack.c.l.b16 %v184
    %v914 = vunpack.c.h.b16 %v184
    %v915 = vunpack.c.l.b16 %v185
    %v916 = vunpack.c.h.b16 %v185
    %v917 = vunpack.c.l.b16 %v186
    %v918 = vunpack.c.h.b16 %v186
    %v919 = vunpack.c.l.b16 %v187
    %v920 = vunpack.c.h.b16 %v187
    %v921 = vunpack.c.l.b16 %v188
    %v922 = vunpack.c.h.b16 %v188
    %v923 = vunpack.c.l.b16 %v189
    %v924 = vunpack.c.h.b16 %v189
    %v925 = vunpack.c.l.b16 %v190
    %v926 = vunpack.c.h.b16 %v190
    %v927 = vunpack.c.l.b16 %v191
    %v928 = vunpack.c.h.b16 %v191
    %v929 = vunpack.c.l.b16 %v192
    %v930 = vunpack.c.h.b16 %v192
    %v931 = vunpack.c.l.b16 %v193
    %v932 = vunpack.c.h.b16 %v193
    %v933 = vunpack.c.l.b16 %v194
    %v934 = vunpack.c.h.b16 %v194
    %v935 = vunpack.c.l.b16 %v195
    %v936 = vunpack.c.h.b16 %v195
    %v937 = vunpack.c.l.b16 %v196
    %v938 = vunpack.c.h.b16 %v196
    %v939 = vunpack.c.l.b16 %v197
    %v940 = vunpack.c.h.b16 %v197
    %v941 = vunpack.c.l.b16 %v198
    %v942 = vunpack.c.h.b16 %v198
    %v943 = vunpack.c.l.b16 %v199
    %v944 = vunpack.c.h.b16 %v199
    %v945 = vunpack.c.l.b16 %v200
    %v946 = vunpack.c.h.b16 %v200
    %v947 = vunpack.c.l.b16 %v201
    %v948 = vunpack.c.h.b16 %v201
    %v949 = vunpack.c.l.b16 %v202
    %v950 = vunpack.c.h.b16 %v202
    %v951 = vunpack.c.l.b16 %v203
    %v952 = vunpack.c.h.b16 %v203
    %v953 = vunpack.c.l.b16 %v204
    %v954 = vunpack.c.h.b16 %v204
    %v955 = vunpack.c.l.b16 %v205
    %v956 = vunpack.c.h.b16 %v205
    %v957 = vunpack.c.l.b16 %v206
    %v958 = vunpack.c.h.b16 %v206
    %v959 = vunpack.c.l.b16 %v207
    %v960 = vunpack.c.h.b16 %v207
    %v961 = vunpack.c.l.b16 %v208
    %v962 = vunpack.c.h.b16 %v208
    %v963 = vunpack.c.l.b16 %v209
    %v964 = vunpack.c.h.b16 %v209
    %v965 = vunpack.c.l.b16 %v210
    %v966 = vunpack.c.h.b16 %v210
    %v967 = vunpack.c.l.b16 %v211
    %v968 = vunpack.c.h.b16 %v211
    %v969 = vunpack.c.l.b16 %v212
    %v970 = vunpack.c.h.b16 %v212
    %v971 = vunpack.c.l.b16 %v213
    %v972 = vunpack.c.h.b16 %v213
    %v973 = vunpack.c.l.b16 %v214
    %v974 = vunpack.c.h.b16 %v214
    %v975 = vunpack.c.l.b16 %v215
    %v976 = vunpack.c.h.b16 %v215
    %v977 = vunpack.c.l.b16 %v216
    %v978 = vunpack.c.h.b16 %v216
    %v979 = vunpack.c.l.b16 %v217
    %v980 = vunpack.c.h.b16 %v217
    %v981 = vunpack.c.l.b16 %v218
    %v982 = vunpack.c.h.b16 %v218
    %v983 = vunpack.c.l.b16 %v219
    %v984 = vunpack.c.h.b16 %v219
    %v985 = vunpack.c.l.b16 %v220
    %v986 = vunpack.c.h.b16 %v220
    %v987 = vunpack.c.l.b16 %v221
    %v988 = vunpack.c.h.b16 %v221
    %v989 = vunpack.c.l.b16 %v222
    %v990 = vunpack.c.h.b16 %v222
    %v991 = vunpack.c.l.b16 %v223
    %v992 = vunpack.c.h.b16 %v223
    %v993 = vunpack.c.l.b16 %v224
    %v994 = vunpack.c.h.b16 %v224
    %v995 = vunpack.c.l.b16 %v225
    %v996 = vunpack.c.h.b16 %v225
    %v997 = vunpack.c.l.b16 %v226
    %v998 = vunpack.c.h.b16 %v226
    %v999 = vunpack.c.l.b16 %v227
    %v1000 = vunpack.c.h.b16 %v227
    %v1001 = vunpack.c.l.b16 %v228
    %v1002 = vunpack.c.h.b16 %v228
    %v1003 = vunpack.c.l.b16 %v229
    %v1004 = vunpack.c.h.b16 %v229
    %v1005 = vunpack.c.l.b16 %v230
    %v1006 = vunpack.c.h.b16 %v230
    %v1007 = vunpack.c.l.b16 %v231
    %v1008 = vunpack.c.h.b16 %v231
    %v1009 = vunpack.c.l.b16 %v232
    %v1010 = vunpack.c.h.b16 %v232
    %v1011 = vunpack.c.l.b16 %v233
    %v1012 = vunpack.c.h.b16 %v233
    %v1013 = vunpack.c.l.b16 %v234
    %v1014 = vunpack.c.h.b16 %v234
    %v1015 = vunpack.c.l.b16 %v235
    %v1016 = vunpack.c.h.b16 %v235
    %v1017 = vunpack.c.l.b16 %v236
    %v1018 = vunpack.c.h.b16 %v236
    %v1019 = vunpack.c.l.b16 %v237
    %v1020 = vunpack.c.h.b16 %v237
    %v1021 = vunpack.c.l.b16 %v238
    %v1022 = vunpack.c.h.b16 %v238
    %v1023 = vunpack.c.l.b16 %v239
    %v1024 = vunpack.c.h.b16 %v239
    %v1025 = vunpack.c.l.b16 %v240
    %v1026 = vunpack.c.h.b16 %v240
    %v1027 = vunpack.c.l.b16 %v241
    %v1028 = vunpack.c.h.b16 %v241
    %v1029 = vunpack.c.l.b16 %v242
    %v1030 = vunpack.c.h.b16 %v242
    %v1031 = vunpack.c.l.b16 %v243
    %v1032 = vunpack.c.h.b16 %v243
    %v1033 = vunpack.c.l.b16 %v244
    %v1034 = vunpack.c.h.b16 %v244
    %v1035 = vunpack.c.l.b16 %v245
    %v1036 = vunpack.c.h.b16 %v245
    %v1037 = vunpack.c.l.b16 %v246
    %v1038 = vunpack.c.h.b16 %v246
    %v1039 = vunpack.c.l.b16 %v247
    %v1040 = vunpack.c.h.b16 %v247
    %v1041 = vunpack.c.l.b16 %v248
    %v1042 = vunpack.c.h.b16 %v248
    %v1043 = vunpack.c.l.b16 %v249
    %v1044 = vunpack.c.h.b16 %v249
    %v1045 = vunpack.c.l.b16 %v250
    %v1046 = vunpack.c.h.b16 %v250
    %v1047 = vunpack.c.l.b16 %v251
    %v1048 = vunpack.c.h.b16 %v251
    %v1049 = vunpack.c.l.b16 %v252
    %v1050 = vunpack.c.h.b16 %v252
    %v1051 = vunpack.c.l.b16 %v253
    %v1052 = vunpack.c.h.b16 %v253
    %v1053 = vunpack.c.l.b16 %v254
    %v1054 = vunpack.c.h.b16 %v254
    %v1055 = vunpack.c.l.b16 %v255
    %v1056 = vunpack.c.h.b16 %v255
    %v1057 = vunpack.c.l.b16 %v256
    %v1058 = vunpack.c.h.b16 %v256
    %v1059 = vunpack.c.l.b16 %v257
    %v1060 = vunpack.c.h.b16 %v257
    %v1061 = vunpack.c.l.b16 %v258
    %v1062 = vunpack.c.h.b16 %v258
    %v1063 = vunpack.c.l.b16 %v259
    %v1064 = vunpack.c.h.b16 %v259
    %v1065 = vunpack.c.l.b16 %v260
    %v1066 = vunpack.c.h.b16 %v260
    %v1067 = vunpack.c.l.b16 %v261
    %v1068 = vunpack.c.h.b16 %v261
    %v1069 = vunpack.c.l.b16 %v262
    %v1070 = vunpack.c.h.b16 %v262
    %v1071 = vunpack.c.l.b16 %v263
    %v1072 = vunpack.c.h.b16 %v263
    %v1073 = vunpack.c.l.b16 %v264
    %v1074 = vunpack.c.h.b16 %v264
    %v1075 = vunpack.c.l.b16 %v265
    %v1076 = vunpack.c.h.b16 %v265
    %v1077 = vunpack.c.l.b16 %v266
    %v1078 = vunpack.c.h.b16 %v266
    %v1079 = vunpack.c.l.b16 %v267
    %v1080 = vunpack.c.h.b16 %v267
    %v1081 = vunpack.c.l.b16 %v268
    %v1082 = vunpack.c.h.b16 %v268
    %v1083 = vunpack.c.l.b16 %v269
    %v1084 = vunpack.c.h.b16 %v269
    %v1085 = vunpack.c.l.b16 %v270
    %v1086 = vunpack.c.h.b16 %v270
    %v1087 = vunpack.c.l.b16 %v271
    %v1088 = vunpack.c.h.b16 %v271
    %v1089 = vunpack.c.l.b16 %v272
    %v1090 = vunpack.c.h.b16 %v272
    %v1091 = vunpack.c.l.b16 %v273
    %v1092 = vunpack.c.h.b16 %v273
    %v1093 = vunpack.c.l.b16 %v274
    %v1094 = vunpack.c.h.b16 %v274
    %v1095 = vunpack.c.l.b16 %v275
    %v1096 = vunpack.c.h.b16 %v275
    %v1097 = vunpack.c.l.b16 %v276
    %v1098 = vunpack.c.h.b16 %v276
    %v1099 = vunpack.c.l.b16 %v277
    %v1100 = vunpack.c.h.b16 %v277
    %v1101 = vunpack.c.l.b16 %v278
    %v1102 = vunpack.c.h.b16 %v278
    %v1103 = vunpack.c.l.b16 %v279
    %v1104 = vunpack.c.h.b16 %v279
    %v1105 = vunpack.c.l.b16 %v280
    %v1106 = vunpack.c.h.b16 %v280
    %v1107 = vunpack.c.l.b16 %v281
    %v1108 = vunpack.c.h.b16 %v281
    %v1109 = vunpack.c.l.b16 %v282
    %v1110 = vunpack.c.h.b16 %v282
    %v1111 = vunpack.c.l.b16 %v283
    %v1112 = vunpack.c.h.b16 %v283
    %v1113 = vunpack.c.l.b16 %v284
    %v1114 = vunpack.c.h.b16 %v284
    %v1115 = vunpack.c.l.b16 %v285
    %v1116 = vunpack.c.h.b16 %v285
    %v1117 = vunpack.c.l.b16 %v286
    %v1118 = vunpack.c.h.b16 %v286
    %v1119 = vunpack.c.l.b16 %v287
    %v1120 = vunpack.c.h.b16 %v287
    %v1121 = vunpack.c.l.b16 %v288
    %v1122 = vunpack.c.h.b16 %v288
    %v1123 = vunpack.c.l.b16 %v289
    %v1124 = vunpack.c.h.b16 %v289
    %v1125 = vunpack.c.l.b16 %v290
    %v1126 = vunpack.c.h.b16 %v290
    %v1127 = vunpack.c.l.b16 %v291
    %v1128 = vunpack.c.h.b16 %v291
    %v1129 = vunpack.c.l.b16 %v292
    %v1130 = vunpack.c.h.b16 %v292
    %v1131 = vunpack.c.l.b16 %v293
    %v1132 = vunpack.c.h.b16 %v293
    %v1133 = vunpack.c.l.b16 %v294
    %v1134 = vunpack.c.h.b16 %v294
    %v1135 = vunpack.c.l.b16 %v295
    %v1136 = vunpack.c.h.b16 %v295
    %v1137 = vunpack.c.l.b16 %v296
    %v1138 = vunpack.c.h.b16 %v296
    %v1139 = vunpack.c.l.b16 %v297
    %v1140 = vunpack.c.h.b16 %v297
    %v1141 = vunpack.c.l.b16 %v298
    %v1142 = vunpack.c.h.b16 %v298
    %v1143 = vunpack.c.l.b16 %v299
    %v1144 = vunpack.c.h.b16 %v299
    %v1145 = vunpack.c.l.b16 %v300
    %v1146 = vunpack.c.h.b16 %v300
    %v1147 = vunpack.c.l.b16 %v301
    %v1148 = vunpack.c.h.b16 %v301
    %v1149 = vunpack.c.l.b16 %v302
    %v1150 = vunpack.c.h.b16 %v302
    %v1151 = vunpack.c.l.b16 %v303
    %v1152 = vunpack.c.h.b16 %v303
    %v1153 = vunpack.c.l.b16 %v304
    %v1154 = vunpack.c.h.b16 %v304
    %v1155 = vunpack.c.l.b16 %v305
    %v1156 = vunpack.c.h.b16 %v305
    %v1157 = vunpack.c.l.b16 %v306
    %v1158 = vunpack.c.h.b16 %v306
    %v1159 = vunpack.c.l.b16 %v307
    %v1160 = vunpack.c.h.b16 %v307
    %v1161 = vunpack.c.l.b16 %v308
    %v1162 = vunpack.c.h.b16 %v308
    %v1163 = vunpack.c.l.b16 %v309
    %v1164 = vunpack.c.h.b16 %v309
    %v1165 = vunpack.c.l.b16 %v310
    %v1166 = vunpack.c.h.b16 %v310
    %v1167 = vunpack.c.l.b16 %v311
    %v1168 = vunpack.c.h.b16 %v311
    %v1169 = vunpack.c.l.b16 %v312
    %v1170 = vunpack.c.h.b16 %v312
    %v1171 = vunpack.c.l.b16 %v313
    %v1172 = vunpack.c.h.b16 %v313
    %v1173 = vunpack.c.l.b16 %v314
    %v1174 = vunpack.c.h.b16 %v314
    %v1175 = vpack.c.b16 %v665, %v663
    %v1176 = vpack.c.b16 %v666, %v664
    %v1177 = vpack.c.b16 %v669, %v667
    %v1178 = vpack.c.b16 %v670, %v668
    %v1179 = vpack.c.b16 %v673, %v671
    %v1180 = vpack.c.b16 %v674, %v672
    %v1181 = vpack.c.b16 %v677, %v675
    %v1182 = vpack.c.b16 %v678, %v676
    %v1183 = vpack.c.b16 %v681, %v679
    %v1184 = vpack.c.b16 %v682, %v680
    %v1185 = vpack.c.b16 %v685, %v683
    %v1186 = vpack.c.b16 %v686, %v684
    %v1187 = vpack.c.b16 %v689, %v687
    %v1188 = vpack.c.b16 %v690, %v688
    %v1189 = vpack.c.b16 %v693, %v691
    %v1190 = vpack.c.b16 %v694, %v692
    %v1191 = vpack.c.b16 %v697, %v695
    %v1192 = vpack.c.b16 %v698, %v696
    %v1193 = vpack.c.b16 %v701, %v699
    %v1194 = vpack.c.b16 %v702, %v700
    %v1195 = vpack.c.b16 %v705, %v703
    %v1196 = vpack.c.b16 %v706, %v704
    %v1197 = vpack.c.b16 %v709, %v707
    %v1198 = vpack.c.b16 %v710, %v708
    %v1199 = vpack.c.b16 %v713, %v711
    %v1200 = vpack.c.b16 %v714, %v712
    %v1201 = vpack.c.b16 %v717, %v715
    %v1202 = vpack.c.b16 %v718, %v716
    %v1203 = vpack.c.b16 %v721, %v719
    %v1204 = vpack.c.b16 %v722, %v720
    %v1205 = vpack.c.b16 %v725, %v723
    %v1206 = vpack.c.b16 %v726, %v724
    %v1207 = vpack.c.b16 %v729, %v727
    %v1208 = vpack.c.b16 %v730, %v728
    %v1209 = vpack.c.b16 %v733, %v731
    %v1210 = vpack.c.b16 %v734, %v732
    %v1211 = vpack.c.b16 %v737, %v735
    %v1212 = vpack.c.b16 %v738, %v736
    %v1213 = vpack.c.b16 %v741, %v739
    %v1214 = vpack.c.b16 %v742, %v740
    %v1215 = vpack.c.b16 %v745, %v743
    %v1216 = vpack.c.b16 %v746, %v744
    %v1217 = vpack.c.b16 %v749, %v747
    %v1218 = vpack.c.b16 %v750, %v748
    %v1219 = vpack.c.b16 %v753, %v751
    %v1220 = vpack.c.b16 %v754, %v752
    %v1221 = vpack.c.b16 %v757, %v755
    %v1222 = vpack.c.b16 %v758, %v756
    %v1223 = vpack.c.b16 %v761, %v759
    %v1224 = vpack.c.b16 %v762, %v760
    %v1225 = vpack.c.b16 %v765, %v763
    %v1226 = vpack.c.b16 %v766, %v764
    %v1227 = vpack.c.b16 %v769, %v767
    %v1228 = vpack.c.b16 %v770, %v768
    %v1229 = vpack.c.b16 %v773, %v771
    %v1230 = vpack.c.b16 %v774, %v772
    %v1231 = vpack.c.b16 %v777, %v775
    %v1232 = vpack.c.b16 %v778, %v776
    %v1233 = vpack.c.b16 %v781, %v779
    %v1234 = vpack.c.b16 %v782, %v780
    %v1235 = vpack.c.b16 %v785, %v783
    %v1236 = vpack.c.b16 %v786, %v784
    %v1237 = vpack.c.b16 %v789, %v787
    %v1238 = vpack.c.b16 %v790, %v788
    %v1239 = vpack.c.b16 %v793, %v791
    %v1240 = vpack.c.b16 %v794, %v792
    %v1241 = vpack.c.b16 %v797, %v795
    %v1242 = vpack.c.b16 %v798, %v796
    %v1243 = vpack.c.b16 %v801, %v799
    %v1244 = vpack.c.b16 %v802, %v800
    %v1245 = vpack.c.b16 %v805, %v803
    %v1246 = vpack.c.b16 %v806, %v804
    %v1247 = vpack.c.b16 %v809, %v807
    %v1248 = vpack.c.b16 %v810, %v808
    %v1249 = vpack.c.b16 %v813, %v811
    %v1250 = vpack.c.b16 %v814, %v812
    %v1251 = vpack.c.b16 %v817, %v815
    %v1252 = vpack.c.b16 %v818, %v816
    %v1253 = vpack.c.b16 %v821, %v819
    %v1254 = vpack.c.b16 %v822, %v820
    %v1255 = vpack.c.b16 %v825, %v823
    %v1256 = vpack.c.b16 %v826, %v824
    %v1257 = vpack.c.b16 %v829, %v827
    %v1258 = vpack.c.b16 %v830, %v828
    %v1259 = vpack.c.b16 %v833, %v831
    %v1260 = vpack.c.b16 %v834, %v832
    %v1261 = vpack.c.b16 %v837, %v835
    %v1262 = vpack.c.b16 %v838, %v836
    %v1263 = vpack.c.b16 %v841, %v839
    %v1264 = vpack.c.b16 %v842, %v840
    %v1265 = vpack.c.b16 %v845, %v843
    %v1266 = vpack.c.b16 %v846, %v844
    %v1267 = vpack.c.b16 %v849, %v847
    %v1268 = vpack.c.b16 %v850, %v848
    %v1269 = vpack.c.b16 %v853, %v851
    %v1270 = vpack.c.b16 %v854, %v852
    %v1271 = vpack.c.b16 %v857, %v855
    %v1272 = vpack.c.b16 %v858, %v856
    %v1273 = vpack.c.b16 %v861, %v859
    %v1274 = vpack.c.b16 %v862, %v860
    %v1275 = vpack.c.b16 %v865, %v863
    %v1276 = vpack.c.b16 %v866, %v864
    %v1277 = vpack.c.b16 %v869, %v867
    %v1278 = vpack.c.b16 %v870, %v868
    %v1279 = vpack.c.b16 %v873, %v871
    %v1280 = vpack.c.b16 %v874, %v872
    %v1281 = vpack.c.b16 %v877, %v875
    %v1282 = vpack.c.b16 %v878, %v876
    %v1283 = vpack.c.b16 %v881, %v879
    %v1284 = vpack.c.b16 %v882, %v880
    %v1285 = vpack.c.b16 %v885, %v883
    %v1286 = vpack.c.b16 %v886, %v884
    %v1287 = vpack.c.b16 %v889, %v887
    %v1288 = vpack.c.b16 %v890, %v888
    %v1289 = vpack.c.b16 %v893, %v891
    %v1290 = vpack.c.b16 %v894, %v892
    %v1291 = vpack.c.b16 %v897, %v895
    %v1292 = vpack.c.b16 %v898, %v896
    %v1293 = vpack.c.b16 %v901, %v899
    %v1294 = vpack.c.b16 %v902, %v900
    %v1295 = vpack.c.b16 %v905, %v903
    %v1296 = vpack.c.b16 %v906, %v904
    %v1297 = vpack.c.b16 %v909, %v907
    %v1298 = vpack.c.b16 %v910, %v908
    %v1299 = vpack.c.b16 %v913, %v911
    %v1300 = vpack.c.b16 %v914, %v912
    %v1301 = vpack.c.b16 %v917, %v915
    %v1302 = vpack.c.b16 %v918, %v916
    %v1303 = vpack.c.b16 %v921, %v919
    %v1304 = vpack.c.b16 %v922, %v920
    %v1305 = vpack.c.b16 %v925, %v923
    %v1306 = vpack.c.b16 %v926, %v924
    %v1307 = vpack.c.b16 %v929, %v927
    %v1308 = vpack.c.b16 %v930, %v928
    %v1309 = vpack.c.b16 %v933, %v931
    %v1310 = vpack.c.b16 %v934, %v932
    %v1311 = vpack.c.b16 %v937, %v935
    %v1312 = vpack.c.b16 %v938, %v936
    %v1313 = vpack.c.b16 %v941, %v939
    %v1314 = vpack.c.b16 %v942, %v940
    %v1315 = vpack.c.b16 %v945, %v943
    %v1316 = vpack.c.b16 %v946, %v944
    %v1317 = vpack.c.b16 %v949, %v947
    %v1318 = vpack.c.b16 %v950, %v948
    %v1319 = vpack.c.b16 %v953, %v951
    %v1320 = vpack.c.b16 %v954, %v952
    %v1321 = vpack.c.b16 %v957, %v955
    %v1322 = vpack.c.b16 %v958, %v956
    %v1323 = vpack.c.b16 %v961, %v959
    %v1324 = vpack.c.b16 %v962, %v960
    %v1325 = vpack.c.b16 %v965, %v963
    %v1326 = vpack.c.b16 %v966, %v964
    %v1327 = vpack.c.b16 %v969, %v967
    %v1328 = vpack.c.b16 %v970, %v968
    %v1329 = vpack.c.b16 %v973, %v971
    %v1330 = vpack.c.b16 %v974, %v972
    %v1331 = vpack.c.b16 %v977, %v975
    %v1332 = vpack.c.b16 %v978, %v976
    %v1333 = vpack.c.b16 %v981, %v979
    %v1334 = vpack.c.b16 %v982, %v980
    %v1335 = vpack.c.b16 %v985, %v983
    %v1336 = vpack.c.b16 %v986, %v984
    %v1337 = vpack.c.b16 %v989, %v987
    %v1338 = vpack.c.b16 %v990, %v988
    %v1339 = vpack.c.b16 %v993, %v991
    %v1340 = vpack.c.b16 %v994, %v992
    %v1341 = vpack.c.b16 %v997, %v995
    %v1342 = vpack.c.b16 %v998, %v996
    %v1343 = vpack.c.b16 %v1001, %v999
    %v1344 = vpack.c.b16 %v1002, %v1000
    %v1345 = vpack.c.b16 %v1005, %v1003
    %v1346 = vpack.c.b16 %v1006, %v1004
    %v1347 = vpack.c.b16 %v1009, %v1007
    %v1348 = vpack.c.b16 %v1010, %v1008
    %v1349 = vpack.c.b16 %v1013, %v1011
    %v1350 = vpack.c.b16 %v1014, %v1012
    %v1351 = vpack.c.b16 %v1017, %v1015
    %v1352 = vpack.c.b16 %v1018, %v1016
    %v1353 = vpack.c.b16 %v1021, %v1019
    %v1354 = vpack.c.b16 %v1022, %v1020
    %v1355 = vpack.c.b16 %v1025, %v1023
    %v1356 = vpack.c.b16 %v1026, %v1024
    %v1357 = vpack.c.b16 %v1029, %v1027
    %v1358 = vpack.c.b16 %v1030, %v1028
    %v1359 = vpack.c.b16 %v1033, %v1031
    %v1360 = vpack.c.b16 %v1034, %v1032
    %v1361 = vpack.c.b16 %v1037, %v1035
    %v1362 = vpack.c.b16 %v1038, %v1036
    %v1363 = vpack.c.b16 %v1041, %v1039
    %v1364 = vpack.c.b16 %v1042, %v1040
    %v1365 = vpack.c.b16 %v1045, %v1043
    %v1366 = vpack.c.b16 %v1046, %v1044
    %v1367 = vpack.c.b16 %v1049, %v1047
    %v1368 = vpack.c.b16 %v1050, %v1048
    %v1369 = vpack.c.b16 %v1053, %v1051
    %v1370 = vpack.c.b16 %v1054, %v1052
    %v1371 = vpack.c.b16 %v1057, %v1055
    %v1372 = vpack.c.b16 %v1058, %v1056
    %v1373 = vpack.c.b16 %v1061, %v1059
    %v1374 = vpack.c.b16 %v1062, %v1060
    %v1375 = vpack.c.b16 %v1065, %v1063
    %v1376 = vpack.c.b16 %v1066, %v1064
    %v1377 = vpack.c.b16 %v1069, %v1067
    %v1378 = vpack.c.b16 %v1070, %v1068
    %v1379 = vpack.c.b16 %v1073, %v1071
    %v1380 = vpack.c.b16 %v1074, %v1072
    %v1381 = vpack.c.b16 %v1077, %v1075
    %v1382 = vpack.c.b16 %v1078, %v1076
    %v1383 = vpack.c.b16 %v1081, %v1079
    %v1384 = vpack.c.b16 %v1082, %v1080
    %v1385 = vpack.c.b16 %v1085, %v1083
    %v1386 = vpack.c.b16 %v1086, %v1084
    %v1387 = vpack.c.b16 %v1089, %v1087
    %v1388 = vpack.c.b16 %v1090, %v1088
    %v1389 = vpack.c.b16 %v1093, %v1091
    %v1390 = vpack.c.b16 %v1094, %v1092
    %v1391 = vpack.c.b16 %v1097, %v1095
    %v1392 = vpack.c.b16 %v1098, %v1096
    %v1393 = vpack.c.b16 %v1101, %v1099
    %v1394 = vpack.c.b16 %v1102, %v1100
    %v1395 = vpack.c.b16 %v1105, %v1103
    %v1396 = vpack.c.b16 %v1106, %v1104
    %v1397 = vpack.c.b16 %v1109, %v1107
    %v1398 = vpack.c.b16 %v1110, %v1108
    %v1399 = vpack.c.b16 %v1113, %v1111
    %v1400 = vpack.c.b16 %v1114, %v1112
    %v1401 = vpack.c.b16 %v1117, %v1115
    %v1402 = vpack.c.b16 %v1118, %v1116
    %v1403 = vpack.c.b16 %v1121, %v1119
    %v1404 = vpack.c.b16 %v1122, %v1120
    %v1405 = vpack.c.b16 %v1125, %v1123
    %v1406 = vpack.c.b16 %v1126, %v1124
    %v1407 = vpack.c.b16 %v1129, %v1127
    %v1408 = vpack.c.b16 %v1130, %v1128
    %v1409 = vpack.c.b16 %v1133, %v1131
    %v1410 = vpack.c.b16 %v1134, %v1132
    %v1411 = vpack.c.b16 %v1137, %v1135
    %v1412 = vpack.c.b16 %v1138, %v1136
    %v1413 = vpack.c.b16 %v1141, %v1139
    %v1414 = vpack.c.b16 %v1142, %v1140
    %v1415 = vpack.c.b16 %v1145, %v1143
    %v1416 = vpack.c.b16 %v1146, %v1144
    %v1417 = vpack.c.b16 %v1149, %v1147
    %v1418 = vpack.c.b16 %v1150, %v1148
    %v1419 = vpack.c.b16 %v1153, %v1151
    %v1420 = vpack.c.b16 %v1154, %v1152
    %v1421 = vpack.c.b16 %v1157, %v1155
    %v1422 = vpack.c.b16 %v1158, %v1156
    %v1423 = vpack.c.b16 %v1161, %v1159
    %v1424 = vpack.c.b16 %v1162, %v1160
    %v1425 = vpack.c.b16 %v1165, %v1163
    %v1426 = vpack.c.b16 %v1166, %v1164
    %v1427 = vpack.c.b16 %v1169, %v1167
    %v1428 = vpack.c.b16 %v1170, %v1168
    %v1429 = vpack.c.b16 %v1173, %v1171
    %v1430 = vpack.c.b16 %v1174, %v1172
    %1687 = vmatprep.subr.bf16.mxu0 %v1176
    %1688 = vmatpush1.bf16.msra.mxu0 %v1175
    %1689 = vmatprep.subr.bf16.mxu0 %v1178
    %1690 = vmatpush1.bf16.msra.mxu0 %v1177
    %1691 = vmatprep.subr.bf16.mxu0 %v1180
    %1692 = vmatpush1.bf16.msra.mxu0 %v1179
    %1693 = vmatprep.subr.bf16.mxu0 %v1182
    %1694 = vmatpush1.bf16.msra.mxu0 %v1181
    %1695 = vmatprep.subr.bf16.mxu0 %v1184
    %1696 = vmatpush1.bf16.msra.mxu0 %v1183
    %1697 = vmatprep.subr.bf16.mxu0 %v1186
    %1698 = vmatpush1.bf16.msra.mxu0 %v1185
    %1699 = vmatprep.subr.bf16.mxu0 %v1188
    %1700 = vmatpush1.bf16.msra.mxu0 %v1187
    %1701 = vmatprep.subr.bf16.mxu0 %v1190
    %1702 = vmatpush1.bf16.msra.mxu0 %v1189
    %1703 = vmatprep.subr.bf16.mxu0 %v1192
    %1704 = vmatpush1.bf16.msra.mxu0 %v1191
    %1705 = vmatprep.subr.bf16.mxu0 %v1194
    %1706 = vmatpush1.bf16.msra.mxu0 %v1193
    %1707 = vmatprep.subr.bf16.mxu0 %v1196
    %1708 = vmatpush1.bf16.msra.mxu0 %v1195
    %1709 = vmatprep.subr.bf16.mxu0 %v1198
    %1710 = vmatpush1.bf16.msra.mxu0 %v1197
    %1711 = vmatprep.subr.bf16.mxu0 %v1200
    %1712 = vmatpush1.bf16.msra.mxu0 %v1199
    %1713 = vmatprep.subr.bf16.mxu0 %v1202
    %1714 = vmatpush1.bf16.msra.mxu0 %v1201
    %1715 = vmatprep.subr.bf16.mxu0 %v1204
    %1716 = vmatpush1.bf16.msra.mxu0 %v1203
    %1717 = vmatprep.subr.bf16.mxu0 %v1206
    %1718 = vmatpush1.bf16.msra.mxu0 %v1205
    %1719 = vmatprep.mubr.bf16.mxu0 %v376
    %1720 = vmatmul.mubr.bf16.gmra.mrb[0].mxu0 %v375
    %v1721 = vpop.f32.mrb[0].mxu0
    %v1722 = vadd.f32 %v320, %v1721
    %v1723 = vpop.f32.mrb[0].mxu0
    %v1724 = vadd.f32 %v324, %v1723
    %v1725 = vpop.f32.mrb[0].mxu0
    %v1726 = vadd.f32 %v320, %v1725
    %v1727 = vpop.f32.mrb[0].mxu0
    %v1728 = vadd.f32 %v324, %v1727
    %1729 = vdwg.mxu0
    %1730 = vmatprep.subr.bf16.mxu0 %v1208
    %1731 = vmatpush1.bf16.msra.mxu0 %v1207
    %1732 = vmatprep.subr.bf16.mxu0 %v1210
    %1733 = vmatpush1.bf16.msra.mxu0 %v1209
    %1734 = vmatprep.subr.bf16.mxu0 %v1212
    %1735 = vmatpush1.bf16.msra.mxu0 %v1211
    %1736 = vmatprep.subr.bf16.mxu0 %v1214
    %1737 = vmatpush1.bf16.msra.mxu0 %v1213
    %1738 = vmatprep.subr.bf16.mxu0 %v1216
    %1739 = vmatpush1.bf16.msra.mxu0 %v1215
    %1740 = vmatprep.subr.bf16.mxu0 %v1218
    %1741 = vmatpush1.bf16.msra.mxu0 %v1217
    %1742 = vmatprep.subr.bf16.mxu0 %v1220
    %1743 = vmatpush1.bf16.msra.mxu0 %v1219
    %1744 = vmatprep.subr.bf16.mxu0 %v1222
    %1745 = vmatpush1.bf16.msra.mxu0 %v1221
    %1746 = vmatprep.subr.bf16.mxu0 %v1224
    %1747 = vmatpush1.bf16.msra.mxu0 %v1223
    %1748 = vmatprep.subr.bf16.mxu0 %v1226
    %1749 = vmatpush1.bf16.msra.mxu0 %v1225
    %1750 = vmatprep.subr.bf16.mxu0 %v1228
    %1751 = vmatpush1.bf16.msra.mxu0 %v1227
    %1752 = vmatprep.subr.bf16.mxu0 %v1230
    %1753 = vmatpush1.bf16.msra.mxu0 %v1229
    %1754 = vmatprep.subr.bf16.mxu0 %v1232
    %1755 = vmatpush1.bf16.msra.mxu0 %v1231
    %1756 = vmatprep.subr.bf16.mxu0 %v1234
    %1757 = vmatpush1.bf16.msra.mxu0 %v1233
    %1758 = vmatprep.subr.bf16.mxu0 %v1236
    %1759 = vmatpush1.bf16.msra.mxu0 %v1235
    %1760 = vmatprep.subr.bf16.mxu0 %v1238
    %1761 = vmatpush1.bf16.msra.mxu0 %v1237
    %1762 = vmatprep.mubr.bf16.mxu0 %v378
    %1763 = vmatmul.mubr.bf16.gmra.mrb[0].mxu0 %v377
    %v1764 = vpop.f32.mrb[0].mxu0
    %v1765 = vadd.f32 %v1722, %v1764
    %v1766 = vpop.f32.mrb[0].mxu0
    %v1767 = vadd.f32 %v1724, %v1766
    %v1768 = vpop.f32.mrb[0].mxu0
    %v1769 = vadd.f32 %v1726, %v1768
    %v1770 = vpop.f32.mrb[0].mxu0
    %v1771 = vadd.f32 %v1728, %v1770
    %1772 = vdwg.mxu0
    %1773 = vmatprep.subr.bf16.mxu0 %v1240
    %1774 = vmatpush1.bf16.msra.mxu0 %v1239
    %1775 = vmatprep.subr.bf16.mxu0 %v1242
    %1776 = vmatpush1.bf16.msra.mxu0 %v1241
    %1777 = vmatprep.subr.bf16.mxu0 %v1244
    %1778 = vmatpush1.bf16.msra.mxu0 %v1243
    %1779 = vmatprep.subr.bf16.mxu0 %v1246
    %1780 = vmatpush1.bf16.msra.mxu0 %v1245
    %1781 = vmatprep.subr.bf16.mxu0 %v1248
    %1782 = vmatpush1.bf16.msra.mxu0 %v1247
    %1783 = vmatprep.subr.bf16.mxu0 %v1250
    %1784 = vmatpush1.bf16.msra.mxu0 %v1249
    %1785 = vmatprep.subr.bf16.mxu0 %v1252
    %1786 = vmatpush1.bf16.msra.mxu0 %v1251
    %1787 = vmatprep.subr.bf16.mxu0 %v1254
    %1788 = vmatpush1.bf16.msra.mxu0 %v1253
    %1789 = vmatprep.subr.bf16.mxu0 %v1256
    %1790 = vmatpush1.bf16.msra.mxu0 %v1255
    %1791 = vmatprep.subr.bf16.mxu0 %v1258
    %1792 = vmatpush1.bf16.msra.mxu0 %v1257
    %1793 = vmatprep.subr.bf16.mxu0 %v1260
    %1794 = vmatpush1.bf16.msra.mxu0 %v1259
    %1795 = vmatprep.subr.bf16.mxu0 %v1262
    %1796 = vmatpush1.bf16.msra.mxu0 %v1261
    %1797 = vmatprep.subr.bf16.mxu0 %v1264
    %1798 = vmatpush1.bf16.msra.mxu0 %v1263
    %1799 = vmatprep.subr.bf16.mxu0 %v1266
    %1800 = vmatpush1.bf16.msra.mxu0 %v1265
    %1801 = vmatprep.subr.bf16.mxu0 %v1268
    %1802 = vmatpush1.bf16.msra.mxu0 %v1267
    %1803 = vmatprep.subr.bf16.mxu0 %v1270
    %1804 = vmatpush1.bf16.msra.mxu0 %v1269
    %1805 = vmatprep.mubr.bf16.mxu0 %v380
    %1806 = vmatmul.mubr.bf16.gmra.mrb[0].mxu0 %v379
    %v1807 = vpop.f32.mrb[0].mxu0
    %v1808 = vadd.f32 %v1765, %v1807
    %v1809 = vpop.f32.mrb[0].mxu0
    %v1810 = vadd.f32 %v1767, %v1809
    %v1811 = vpop.f32.mrb[0].mxu0
    %v1812 = vadd.f32 %v1769, %v1811
    %v1813 = vpop.f32.mrb[0].mxu0
    %v1814 = vadd.f32 %v1771, %v1813
    %1815 = vdwg.mxu0
    %1816 = vmatprep.subr.bf16.mxu0 %v1272
    %1817 = vmatpush1.bf16.msra.mxu0 %v1271
    %1818 = vmatprep.subr.bf16.mxu0 %v1274
    %1819 = vmatpush1.bf16.msra.mxu0 %v1273
    %1820 = vmatprep.subr.bf16.mxu0 %v1276
    %1821 = vmatpush1.bf16.msra.mxu0 %v1275
    %1822 = vmatprep.subr.bf16.mxu0 %v1278
    %1823 = vmatpush1.bf16.msra.mxu0 %v1277
    %1824 = vmatprep.subr.bf16.mxu0 %v1280
    %1825 = vmatpush1.bf16.msra.mxu0 %v1279
    %1826 = vmatprep.subr.bf16.mxu0 %v1282
    %1827 = vmatpush1.bf16.msra.mxu0 %v1281
    %1828 = vmatprep.subr.bf16.mxu0 %v1284
    %1829 = vmatpush1.bf16.msra.mxu0 %v1283
    %1830 = vmatprep.subr.bf16.mxu0 %v1286
    %1831 = vmatpush1.bf16.msra.mxu0 %v1285
    %1832 = vmatprep.subr.bf16.mxu0 %v1288
    %1833 = vmatpush1.bf16.msra.mxu0 %v1287
    %1834 = vmatprep.subr.bf16.mxu0 %v1290
    %1835 = vmatpush1.bf16.msra.mxu0 %v1289
    %1836 = vmatprep.subr.bf16.mxu0 %v1292
    %1837 = vmatpush1.bf16.msra.mxu0 %v1291
    %1838 = vmatprep.subr.bf16.mxu0 %v1294
    %1839 = vmatpush1.bf16.msra.mxu0 %v1293
    %1840 = vmatprep.subr.bf16.mxu0 %v1296
    %1841 = vmatpush1.bf16.msra.mxu0 %v1295
    %1842 = vmatprep.subr.bf16.mxu0 %v1298
    %1843 = vmatpush1.bf16.msra.mxu0 %v1297
    %1844 = vmatprep.subr.bf16.mxu0 %v1300
    %1845 = vmatpush1.bf16.msra.mxu0 %v1299
    %1846 = vmatprep.subr.bf16.mxu0 %v1302
    %1847 = vmatpush1.bf16.msra.mxu0 %v1301
    %1848 = vmatprep.mubr.bf16.mxu0 %v382
    %1849 = vmatmul.mubr.bf16.gmra.mrb[0].mxu0 %v381
    %v1850 = vpop.f32.mrb[0].mxu0
    %v1851 = vadd.f32 %v1808, %v1850
    %v1852 = vpop.f32.mrb[0].mxu0
    %v1853 = vadd.f32 %v1810, %v1852
    %v1854 = vpop.f32.mrb[0].mxu0
    %v1855 = vadd.f32 %v1812, %v1854
    %v1856 = vpop.f32.mrb[0].mxu0
    %v1857 = vadd.f32 %v1814, %v1856
    %1858 = vdwg.mxu0
    %1859 = vmatprep.subr.bf16.mxu0 %v1304
    %1860 = vmatpush1.bf16.msra.mxu0 %v1303
    %1861 = vmatprep.subr.bf16.mxu0 %v1306
    %1862 = vmatpush1.bf16.msra.mxu0 %v1305
    %1863 = vmatprep.subr.bf16.mxu0 %v1308
    %1864 = vmatpush1.bf16.msra.mxu0 %v1307
    %1865 = vmatprep.subr.bf16.mxu0 %v1310
    %1866 = vmatpush1.bf16.msra.mxu0 %v1309
    %1867 = vmatprep.subr.bf16.mxu0 %v1312
    %1868 = vmatpush1.bf16.msra.mxu0 %v1311
    %1869 = vmatprep.subr.bf16.mxu0 %v1314
    %1870 = vmatpush1.bf16.msra.mxu0 %v1313
    %1871 = vmatprep.subr.bf16.mxu0 %v1316
    %1872 = vmatpush1.bf16.msra.mxu0 %v1315
    %1873 = vmatprep.subr.bf16.mxu0 %v1318
    %1874 = vmatpush1.bf16.msra.mxu0 %v1317
    %1875 = vmatprep.subr.bf16.mxu0 %v1320
    %1876 = vmatpush1.bf16.msra.mxu0 %v1319
    %1877 = vmatprep.subr.bf16.mxu0 %v1322
    %1878 = vmatpush1.bf16.msra.mxu0 %v1321
    %1879 = vmatprep.subr.bf16.mxu0 %v1324
    %1880 = vmatpush1.bf16.msra.mxu0 %v1323
    %1881 = vmatprep.subr.bf16.mxu0 %v1326
    %1882 = vmatpush1.bf16.msra.mxu0 %v1325
    %1883 = vmatprep.subr.bf16.mxu0 %v1328
    %1884 = vmatpush1.bf16.msra.mxu0 %v1327
    %1885 = vmatprep.subr.bf16.mxu0 %v1330
    %1886 = vmatpush1.bf16.msra.mxu0 %v1329
    %1887 = vmatprep.subr.bf16.mxu0 %v1332
    %1888 = vmatpush1.bf16.msra.mxu0 %v1331
    %1889 = vmatprep.subr.bf16.mxu0 %v1334
    %1890 = vmatpush1.bf16.msra.mxu0 %v1333
    %1891 = vmatprep.mubr.bf16.mxu0 %v384
    %1892 = vmatmul.mubr.bf16.gmra.mrb[0].mxu0 %v383
    %v1893 = vpop.f32.mrb[0].mxu0
    %v1894 = vadd.f32 %v1851, %v1893
    %v1895 = vpop.f32.mrb[0].mxu0
    %v1896 = vadd.f32 %v1853, %v1895
    %v1897 = vpop.f32.mrb[0].mxu0
    %v1898 = vadd.f32 %v1855, %v1897
    %v1899 = vpop.f32.mrb[0].mxu0
    %v1900 = vadd.f32 %v1857, %v1899
    %1901 = vdwg.mxu0
    %1902 = vmatprep.subr.bf16.mxu0 %v1336
    %1903 = vmatpush1.bf16.msra.mxu0 %v1335
    %1904 = vmatprep.subr.bf16.mxu0 %v1338
    %1905 = vmatpush1.bf16.msra.mxu0 %v1337
    %1906 = vmatprep.subr.bf16.mxu0 %v1340
    %1907 = vmatpush1.bf16.msra.mxu0 %v1339
    %1908 = vmatprep.subr.bf16.mxu0 %v1342
    %1909 = vmatpush1.bf16.msra.mxu0 %v1341
    %1910 = vmatprep.subr.bf16.mxu0 %v1344
    %1911 = vmatpush1.bf16.msra.mxu0 %v1343
    %1912 = vmatprep.subr.bf16.mxu0 %v1346
    %1913 = vmatpush1.bf16.msra.mxu0 %v1345
    %1914 = vmatprep.subr.bf16.mxu0 %v1348
    %1915 = vmatpush1.bf16.msra.mxu0 %v1347
    %1916 = vmatprep.subr.bf16.mxu0 %v1350
    %1917 = vmatpush1.bf16.msra.mxu0 %v1349
    %1918 = vmatprep.subr.bf16.mxu0 %v1352
    %1919 = vmatpush1.bf16.msra.mxu0 %v1351
    %1920 = vmatprep.subr.bf16.mxu0 %v1354
    %1921 = vmatpush1.bf16.msra.mxu0 %v1353
    %1922 = vmatprep.subr.bf16.mxu0 %v1356
    %1923 = vmatpush1.bf16.msra.mxu0 %v1355
    %1924 = vmatprep.subr.bf16.mxu0 %v1358
    %1925 = vmatpush1.bf16.msra.mxu0 %v1357
    %1926 = vmatprep.subr.bf16.mxu0 %v1360
    %1927 = vmatpush1.bf16.msra.mxu0 %v1359
    %1928 = vmatprep.subr.bf16.mxu0 %v1362
    %1929 = vmatpush1.bf16.msra.mxu0 %v1361
    %1930 = vmatprep.subr.bf16.mxu0 %v1364
    %1931 = vmatpush1.bf16.msra.mxu0 %v1363
    %1932 = vmatprep.subr.bf16.mxu0 %v1366
    %1933 = vmatpush1.bf16.msra.mxu0 %v1365
    %1934 = vmatprep.mubr.bf16.mxu0 %v386
    %1935 = vmatmul.mubr.bf16.gmra.mrb[0].mxu0 %v385
    %v1936 = vpop.f32.mrb[0].mxu0
    %v1937 = vadd.f32 %v1894, %v1936
    %v1938 = vpop.f32.mrb[0].mxu0
    %v1939 = vadd.f32 %v1896, %v1938
    %v1940 = vpop.f32.mrb[0].mxu0
    %v1941 = vadd.f32 %v1898, %v1940
    %v1942 = vpop.f32.mrb[0].mxu0
    %v1943 = vadd.f32 %v1900, %v1942
    %1944 = vdwg.mxu0
    %1945 = vmatprep.subr.bf16.mxu0 %v1368
    %1946 = vmatpush1.bf16.msra.mxu0 %v1367
    %1947 = vmatprep.subr.bf16.mxu0 %v1370
    %1948 = vmatpush1.bf16.msra.mxu0 %v1369
    %1949 = vmatprep.subr.bf16.mxu0 %v1372
    %1950 = vmatpush1.bf16.msra.mxu0 %v1371
    %1951 = vmatprep.subr.bf16.mxu0 %v1374
    %1952 = vmatpush1.bf16.msra.mxu0 %v1373
    %1953 = vmatprep.subr.bf16.mxu0 %v1376
    %1954 = vmatpush1.bf16.msra.mxu0 %v1375
    %1955 = vmatprep.subr.bf16.mxu0 %v1378
    %1956 = vmatpush1.bf16.msra.mxu0 %v1377
    %1957 = vmatprep.subr.bf16.mxu0 %v1380
    %1958 = vmatpush1.bf16.msra.mxu0 %v1379
    %1959 = vmatprep.subr.bf16.mxu0 %v1382
    %1960 = vmatpush1.bf16.msra.mxu0 %v1381
    %1961 = vmatprep.subr.bf16.mxu0 %v1384
    %1962 = vmatpush1.bf16.msra.mxu0 %v1383
    %1963 = vmatprep.subr.bf16.mxu0 %v1386
    %1964 = vmatpush1.bf16.msra.mxu0 %v1385
    %1965 = vmatprep.subr.bf16.mxu0 %v1388
    %1966 = vmatpush1.bf16.msra.mxu0 %v1387
    %1967 = vmatprep.subr.bf16.mxu0 %v1390
    %1968 = vmatpush1.bf16.msra.mxu0 %v1389
    %1969 = vmatprep.subr.bf16.mxu0 %v1392
    %1970 = vmatpush1.bf16.msra.mxu0 %v1391
    %1971 = vmatprep.subr.bf16.mxu0 %v1394
    %1972 = vmatpush1.bf16.msra.mxu0 %v1393
    %1973 = vmatprep.subr.bf16.mxu0 %v1396
    %1974 = vmatpush1.bf16.msra.mxu0 %v1395
    %1975 = vmatprep.subr.bf16.mxu0 %v1398
    %1976 = vmatpush1.bf16.msra.mxu0 %v1397
    %1977 = vmatprep.mubr.bf16.mxu0 %v388
    %1978 = vmatmul.mubr.bf16.gmra.mrb[0].mxu0 %v387
    %v1979 = vpop.f32.mrb[0].mxu0
    %v1980 = vadd.f32 %v1937, %v1979
    %v1981 = vpop.f32.mrb[0].mxu0
    %v1982 = vadd.f32 %v1939, %v1981
    %v1983 = vpop.f32.mrb[0].mxu0
    %v1984 = vadd.f32 %v1941, %v1983
    %v1985 = vpop.f32.mrb[0].mxu0
    %v1986 = vadd.f32 %v1943, %v1985
    %1987 = vdwg.mxu0
    %1988 = vmatprep.subr.bf16.mxu0 %v1400
    %1989 = vmatpush1.bf16.msra.mxu0 %v1399
    %1990 = vmatprep.subr.bf16.mxu0 %v1402
    %1991 = vmatpush1.bf16.msra.mxu0 %v1401
    %1992 = vmatprep.subr.bf16.mxu0 %v1404
    %1993 = vmatpush1.bf16.msra.mxu0 %v1403
    %1994 = vmatprep.subr.bf16.mxu0 %v1406
    %1995 = vmatpush1.bf16.msra.mxu0 %v1405
    %1996 = vmatprep.subr.bf16.mxu0 %v1408
    %1997 = vmatpush1.bf16.msra.mxu0 %v1407
    %1998 = vmatprep.subr.bf16.mxu0 %v1410
    %1999 = vmatpush1.bf16.msra.mxu0 %v1409
    %2000 = vmatprep.subr.bf16.mxu0 %v1412
    %2001 = vmatpush1.bf16.msra.mxu0 %v1411
    %2002 = vmatprep.subr.bf16.mxu0 %v1414
    %2003 = vmatpush1.bf16.msra.mxu0 %v1413
    %2004 = vmatprep.subr.bf16.mxu0 %v1416
    %2005 = vmatpush1.bf16.msra.mxu0 %v1415
    %2006 = vmatprep.subr.bf16.mxu0 %v1418
    %2007 = vmatpush1.bf16.msra.mxu0 %v1417
    %2008 = vmatprep.subr.bf16.mxu0 %v1420
    %2009 = vmatpush1.bf16.msra.mxu0 %v1419
    %2010 = vmatprep.subr.bf16.mxu0 %v1422
    %2011 = vmatpush1.bf16.msra.mxu0 %v1421
    %2012 = vmatprep.subr.bf16.mxu0 %v1424
    %2013 = vmatpush1.bf16.msra.mxu0 %v1423
    %2014 = vmatprep.subr.bf16.mxu0 %v1426
    %2015 = vmatpush1.bf16.msra.mxu0 %v1425
    %2016 = vmatprep.subr.bf16.mxu0 %v1428
    %2017 = vmatpush1.bf16.msra.mxu0 %v1427
    %2018 = vmatprep.subr.bf16.mxu0 %v1430
    %2019 = vmatpush1.bf16.msra.mxu0 %v1429
    %2020 = vmatprep.mubr.bf16.mxu0 %v390
    %2021 = vmatmul.mubr.bf16.gmra.mrb[0].mxu0 %v389
    %v2022 = vpop.f32.mrb[0].mxu0
    %v2023 = vadd.f32 %v1980, %v2022
    %v2024 = vpop.f32.mrb[0].mxu0
    %v2025 = vadd.f32 %v1982, %v2024
    %v2026 = vpop.f32.mrb[0].mxu0
    %v2027 = vadd.f32 %v1984, %v2026
    %v2028 = vpop.f32.mrb[0].mxu0
    %v2029 = vadd.f32 %v1986, %v2028
    %2030 = vdwg.mxu0
    %v2031 = vxor.u32 %v2023, 2147483648
    %v2032 = vxor.u32 %v2025, 2147483648
    %v2033 = vxor.u32 %v2027, 2147483648
    %v2034 = vxor.u32 %v2029, 2147483648
    %v2035 = vmul.f32 %v2031, 1.442695
    %v2036 = vpow.pop %v2035
    %v2037 = vmul.f32 %v2032, 1.442695
    %v2038 = vpow.pop %v2037
    %v2039 = vmul.f32 %v2033, 1.442695
    %v2040 = vpow.pop %v2039
    %v2041 = vmul.f32 %v2034, 1.442695
    %v2042 = vpow.pop %v2041
    %v2043 = vadd.f32 %v2036, 1.0
    %v2044 = vadd.f32 %v2038, 1.0
    %v2045 = vadd.f32 %v2040, 1.0
    %v2046 = vadd.f32 %v2042, 1.0
    %v2047 = vrcp.pop %v2043
    %v2048 = vmul.f32 1.0, %v2047
    %v2049 = vrcp.pop %v2044
    %v2050 = vmul.f32 1.0, %v2049
    %v2051 = vrcp.pop %v2045
    %v2052 = vmul.f32 1.0, %v2051
    %v2053 = vrcp.pop %v2046
    %v2054 = vmul.f32 1.0, %v2053
    %2055 = vst [vmem:[#allocation7] sm:$0xff] %v2048
    %2056 = vst [vmem:[#allocation7 + $0x8] sm:$0xff] %v2050
    %2057 = vst [vmem:[#allocation7 + $0x10] sm:$0xff] %v2052
    %2058 = vst [vmem:[#allocation7 + $0x18] sm:$0xff] %v2054
    // Predicated region
    $region22: #{tpu_custom_call.1} parent=1 // pred_check
      _
    $region23: #{tpu_custom_call.1} parent=1 // pred_check_branch
      %2060 = sbr.rel (0) target = $region25
    $region24: #{tpu_custom_call.1} parent=1 // pred_region
      %s2062 = ssub.s32 512, 512
      %2063 = vsyncadd [#allocation4], %s2062
      %s2064 = sshll.u32 [#allocation7], 4
      %s2065 = int_to_ptr.vmem [resolvable:$true] %s2064
      %2070 = dma.vmem_to_hbm [thread:$0]  %s2065, 512, %s3, [#allocation4], 256, 256, 16
    $region25: #{tpu_custom_call.1} parent=1 // pred_fallthru
      _
    // Predicated region
    $region26: #{tpu_custom_call.1} parent=1 // pred_check
      _
    $region27: #{tpu_custom_call.1} parent=1 // pred_check_branch
      %2072 = sbr.rel (0) target = $region29
    $region28: #{tpu_custom_call.1} parent=1 // pred_region
      %2073 = dma.done [#allocation4], 512
    $region29: #{tpu_custom_call.1} parent=1 // pred_fallthru
      _
    %2074 = vsyncpa [#allocation3], 1
    %2075 = vsyncpa [#allocation6], 1
    %2076 = vsyncpa [#allocation4], 1

</llo_original>
